<compile_context>
chip_gen: v7x
topology: tpu7x:2x2x1
jax: 0.10.0
libtpu: 0.0.40
codegen_flags: <defaults>
</compile_context>

<pallas_src>
import jax
import jax.numpy as jnp
from jax import lax
from jax.experimental import pallas as pl
from jax.experimental.pallas import tpu as pltpu

REGR_WEIGHT = 1.0
_OUT_LANES = 128


def _loss_kernel(tl_heat_ref, br_heat_ref, tl_hgt_ref, br_hgt_ref,
                 regr_ref, tag_ref, out_ref, acc_ref):
    """Grid = (B, S, T); T tiles the flattened (padded) H*W axis.

    acc_ref (4, C, 128) accumulates elementwise focal partials across T:
      plane 0: tl focal term   plane 1: tl pos indicator
      plane 2: br focal term   plane 3: br pos indicator
    At the last tile the tiny offset / pull / push terms are computed from the
    gathered K-vectors, the 4 planes are reduced to scalars, and everything is
    written to out_ref lanes 0..8 (epilogue lanes only on split s == 0).
    """
    s = pl.program_id(1)
    t = pl.program_id(2)
    n_t = pl.num_programs(2)
    tile_hw = tl_heat_ref.shape[2]
    n_chunks = tile_hw // _OUT_LANES

    @pl.when(t == 0)
    def _():
        acc_ref[...] = jnp.zeros_like(acc_ref)

    def focal_chunk(logits, gt):
        x = logits.astype(jnp.float32)
        g = gt.astype(jnp.float32)
        # Two-sided stable log-sigmoid: ea = exp(-|x|) <= 1, so nothing overflows and
        # no log(0) / inf*0 NaN appears for any logit (including -1e4 lane padding).
        ax = jnp.abs(x)
        ea = jnp.exp(-ax)
        log1pea = jnp.log(1.0 + ea)                  # in [0, log 2]
        log_p = jnp.minimum(x, 0.0) - log1pea        # log sigmoid(x)
        log_1mp = -jnp.maximum(x, 0.0) - log1pea     # log sigmoid(-x)
        p = jnp.exp(log_p)                           # sigmoid(x)  (EUP, no VALU divide)
        q = jnp.exp(log_1mp)                         # 1 - p
        pos = g == 1.0
        neg_w = jnp.square(jnp.square(1.0 - g))      # (1 - gt)^4
        pos_term = log_p * q * q
        neg_term = log_1mp * p * p * neg_w
        # gt <= 1 -> pos / neg branches exhaustive and disjoint: single select.
        term = jnp.where(pos, pos_term, neg_term)
        return term, jnp.where(pos, 1.0, 0.0)

    def do_chunk(start):
        sl = pl.ds(start, _OUT_LANES)
        tl_t, tl_p = focal_chunk(tl_heat_ref[0, :, sl], tl_hgt_ref[0, :, sl])
        br_t, br_p = focal_chunk(br_heat_ref[0, :, sl], br_hgt_ref[0, :, sl])
        # Elementwise (C,128) accumulation: no per-tile cross-lane XLU reduction.
        acc_ref[0] += tl_t
        acc_ref[1] += tl_p
        acc_ref[2] += br_t
        acc_ref[3] += br_p

    if n_chunks <= 8:
        for k in range(n_chunks):
            do_chunk(k * _OUT_LANES)
    else:
        def body(k, carry):
            do_chunk(pl.multiple_of(k * _OUT_LANES, _OUT_LANES))
            return carry
        lax.fori_loop(0, n_chunks, body, 0)

    @pl.when(t == n_t - 1)
    def _():
        eps = 1e-4
        lane = lax.broadcasted_iota(jnp.int32, (1, _OUT_LANES), 1)

        # Single deferred reduction of the lane accumulators.
        tl_ls = jnp.sum(acc_ref[0])
        tl_np = jnp.sum(acc_ref[1])
        br_ls = jnp.sum(acc_ref[2])
        br_np = jnp.sum(acc_ref[3])

        regr = regr_ref[0].astype(jnp.float32)        # (8, K)
        tags = tag_ref[0].astype(jnp.float32)         # (3, K)
        m_row = tags[2:3, :]                          # (1, K)

        def smooth_l1(pred, gt):                      # (2, K) each
            d = pred - gt
            ad = jnp.abs(d)
            per = jnp.where(ad < 1.0, 0.5 * d * d, ad - 0.5)
            return jnp.sum(per * m_row)

        sl1_tl = smooth_l1(regr[0:2, :], regr[2:4, :])
        sl1_br = smooth_l1(regr[4:6, :], regr[6:8, :])
        mask_sum = jnp.sum(m_row)

        t0 = tags[0:1, :]
        t1 = tags[1:2, :]
        tmean = 0.5 * (t0 + t1)                       # (1, K)
        inv_num = 1.0 / (mask_sum + eps)
        pull = jnp.sum((jnp.square(t0 - tmean) + jnp.square(t1 - tmean))
                       * inv_num * m_row)

        # Column copies via a single small transpose (replaces the (K,K) eye-mask reduce).
        tags_t = jnp.transpose(tags)                  # (K, 3)
        tmean_c = 0.5 * (tags_t[:, 0:1] + tags_t[:, 1:2])   # (K, 1)
        m_col = tags_t[:, 2:3]                        # (K, 1)
        pair_mask = (m_col + m_row) == 2.0            # (K, K)
        dist = jnp.maximum(2.0 - jnp.abs(tmean_c - tmean), 0.0)
        dist = dist - 2.0 * inv_num
        dist = dist / ((mask_sum - 1.0) * mask_sum + eps)
        push = jnp.sum(jnp.where(pair_mask, dist, 0.0))

        # Epilogue (offset/pull/push/mask) counted once per batch: only split s == 0.
        first = jnp.where(s == 0, 1.0, 0.0)
        vec = (jnp.where(lane == 0, tl_ls, 0.0)
               + jnp.where(lane == 1, tl_np, 0.0)
               + jnp.where(lane == 2, br_ls, 0.0)
               + jnp.where(lane == 3, br_np, 0.0)
               + first * (jnp.where(lane == 4, sl1_tl, 0.0)
                          + jnp.where(lane == 5, sl1_br, 0.0)
                          + jnp.where(lane == 6, mask_sum, 0.0)
                          + jnp.where(lane == 7, pull, 0.0)
                          + jnp.where(lane == 8, push, 0.0)))
        out_ref[0, 0] = vec.astype(out_ref.dtype)


def _gather_feat_ck(feat, ind):
    """(B, C, H, W), (B, K) int -> (B, C, K) flat gather (no NHWC transpose copies)."""
    B, C, H, W = feat.shape
    K = ind.shape[1]
    f = feat.reshape(B, C, H * W)
    idx = jnp.broadcast_to(ind[:, None, :].astype(jnp.int32), (B, C, K))
    return jnp.take_along_axis(f, idx, axis=2)


def transpose_and_gather_feat(feat, ind):
    """(B, C, H, W), (B, K) -> (B, K, C)  (torch gather semantics, for the reference)."""
    return jnp.transpose(_gather_feat_ck(feat, ind), (0, 2, 1))


def _prep_heat(pred, gt, heat_dtype):
    """Optionally narrow the heat streams for bandwidth; positives in gt stay exact."""
    if heat_dtype is None:
        return pred, gt
    hd = jnp.dtype(heat_dtype)
    if jnp.dtype(pred.dtype).itemsize > hd.itemsize:
        pred = pred.astype(hd)
    if jnp.dtype(gt.dtype).itemsize > hd.itemsize:
        # Positive-preserving downcast: gt < 1 must never round up to exactly 1.0
        # (would create spurious positives and change num_pos).
        below_one = jnp.asarray(1.0 - 2.0 ** -8, hd)     # largest bf16 < 1.0
        gt = jnp.where(gt >= 1.0, jnp.asarray(1.0, hd),
                       jnp.minimum(gt.astype(hd), below_one))
    return pred, gt


def _heat_rounded_inputs(outs, targets, heat_dtype):
    """Inputs with the heat maps rounded exactly as the kernel streams them (for tests)."""
    tl_heat, br_heat, tl_tag, br_tag, tl_regr, br_regr = outs
    tl_hg, br_hg, *rest = targets
    tph, tpg = _prep_heat(tl_heat, tl_hg, heat_dtype)
    bph, bpg = _prep_heat(br_heat, br_hg, heat_dtype)
    f32 = jnp.float32
    return ((tph.astype(f32), bph.astype(f32), tl_tag, br_tag, tl_regr, br_regr),
            (tpg.astype(f32), bpg.astype(f32), *rest))


def _pick_tile_hw(hw_pad, c, itemsize, target_bytes):
    """Largest multiple-of-128 divisor of hw_pad whose heat block fits target_bytes."""
    best = _OUT_LANES
    t = _OUT_LANES
    while t <= hw_pad:
        if hw_pad % t == 0 and c * t * itemsize <= target_bytes:
            best = t
        t += _OUT_LANES
    return best


def cornernet_loss(outs, targets, *, tile_hw=None, hw_splits=None,
                   heat_dtype=jnp.bfloat16):
    tl_heat, br_heat, tl_tag, br_tag, tl_regr, br_regr = outs
    (tl_heat_gt, br_heat_gt, tl_tag_gt, br_tag_gt,
     tl_regr_gt, br_regr_gt, tag_mask) = targets

    B, C, H, W = tl_heat.shape
    K = tag_mask.shape[1]
    HW = H * W
    HW_pad = ((HW + _OUT_LANES - 1) // _OUT_LANES) * _OUT_LANES

    # ---- tiny gathered K-streams ----
    # TODO(synk): the reference forward calls tranpose_and_gather_feat(tl_regr, tl_tag)
    # with the float embedding maps as "indices" (torch.gather would reject them); we
    # keep the original CornerNet semantics and gather with the GT index tensors.
    tl_regr_g = _gather_feat_ck(tl_regr, tl_tag_gt)                 # (B, 2, K)
    br_regr_g = _gather_feat_ck(br_regr, br_tag_gt)
    regr_small = jnp.concatenate(
        [tl_regr_g, jnp.transpose(tl_regr_gt, (0, 2, 1)),
         br_regr_g, jnp.transpose(br_regr_gt, (0, 2, 1))],
        axis=1).astype(jnp.float32)                                 # (B, 8, K)

    tl_tag_g = _gather_feat_ck(tl_tag, tl_tag_gt)                   # (B, 1, K)
    br_tag_g = _gather_feat_ck(br_tag, br_tag_gt)
    tag_small = jnp.concatenate(
        [tl_tag_g, br_tag_g, tag_mask[:, None, :].astype(tl_tag_g.dtype)],
        axis=1).astype(jnp.float32)                                 # (B, 3, K)

    # ---- heat streams: optional bf16 narrowing + 128-lane padding ----
    tl_heat_s, tl_hgt_s = _prep_heat(tl_heat, tl_heat_gt, heat_dtype)
    br_heat_s, br_hgt_s = _prep_heat(br_heat, br_heat_gt, heat_dtype)

    def flat_pad(x, fill):
        x = x.reshape(B, C, HW)
        if HW_pad != HW:
            x = jnp.pad(x, ((0, 0), (0, 0), (0, HW_pad - HW)),
                        constant_values=fill)
        return x

    # Padding: pred = large negative logit, gt = 0  -> focal contribution is exactly 0.
    tl_heat_f = flat_pad(tl_heat_s, -1e4)
    br_heat_f = flat_pad(br_heat_s, -1e4)
    tl_hgt_f = flat_pad(tl_hgt_s, 0.0)
    br_hgt_f = flat_pad(br_hgt_s, 0.0)

    itemsize = max(jnp.dtype(a.dtype).itemsize
                   for a in (tl_heat_f, br_heat_f, tl_hgt_f, br_hgt_f))

    try:
        vmem_cap = int(getattr(pltpu.get_tpu_info(), "vmem_capacity_bytes",
                               64 * 1024 * 1024))
    except Exception:
        vmem_cap = 64 * 1024 * 1024          # conservative (v7x-sized) fallback

    if tile_hw is None:
        # 4 double-buffered heat streams kept under ~half the scoped VMEM budget,
        # with a >=1 MiB floor so per-grid-step overhead stays amortised.
        target = max(1 << 20, min(2 << 20, (vmem_cap // 2) // (4 * 2)))
        tile_hw = _pick_tile_hw(HW_pad, C, itemsize, target)
    assert tile_hw % _OUT_LANES == 0 and HW_pad % tile_hw == 0, (HW_pad, tile_hw)
    n_tiles = HW_pad // tile_hw

    if hw_splits is None:
        # Expose parallelism beyond the batch axis for the 2-TC v7x when B is 1/odd.
        hw_splits = 2 if (B % 2 == 1 and n_tiles % 2 == 0) else 1
    if n_tiles % hw_splits != 0:
        hw_splits = 1
    tiles_per_split = n_tiles // hw_splits

    heat_spec = pl.BlockSpec((1, C, tile_hw),
                             lambda b, s, t: (b, 0, s * tiles_per_split + t))
    regr_spec = pl.BlockSpec((1, 8, K), lambda b, s, t: (b, 0, 0))
    tag_spec = pl.BlockSpec((1, 3, K), lambda b, s, t: (b, 0, 0))
    out_spec = pl.BlockSpec((1, 1, 1, _OUT_LANES), lambda b, s, t: (b, s, 0, 0))

    # Explicit VMEM budget, clamped to the device's capacity (64 MiB on v7x).
    heat_block_bytes = C * tile_hw * itemsize
    est = (4 * 2 * heat_block_bytes                   # 4 double-buffered heat streams
           + 2 * 2 * (8 + 3) * K * 4                  # small gathered streams
           + 2 * _OUT_LANES * 4                       # out block
           + 4 * C * _OUT_LANES * 4)                  # lane accumulator
    vmem_ceiling = min(100 << 20, (vmem_cap * 3) // 4)
    vmem_limit = int(min(vmem_ceiling, max(8 << 20, 2 * est)))

    partials = pl.pallas_call(
        _loss_kernel,
        out_shape=jax.ShapeDtypeStruct((B, hw_splits, 1, _OUT_LANES), jnp.float32),
        grid_spec=pltpu.PrefetchScalarGridSpec(
            num_scalar_prefetch=0,
            grid=(B, hw_splits, tiles_per_split),
            in_specs=[heat_spec, heat_spec, heat_spec, heat_spec,
                      regr_spec, tag_spec],
            out_specs=out_spec,
            scratch_shapes=[pltpu.VMEM((4, C, _OUT_LANES), jnp.float32)]),
        compiler_params=pltpu.CompilerParams(
            dimension_semantics=("parallel", "parallel", "arbitrary"),
            vmem_limit_bytes=vmem_limit),
    )(tl_heat_f, br_heat_f, tl_hgt_f, br_hgt_f, regr_small, tag_small)

    # ---- tiny scalar combine (normalisations, /B) in plain JAX ----
    p = jnp.sum(partials[:, :, 0, :], axis=1)         # (B, 128)
    tl_ls, tl_np = p[:, 0], p[:, 1]
    br_ls, br_np = p[:, 2], p[:, 3]
    heat_loss = jnp.sum(
        jnp.where(tl_np == 0.0, -tl_ls, -tl_ls / jnp.maximum(tl_np, 1.0))
        + jnp.where(br_np == 0.0, -br_ls, -br_ls / jnp.maximum(br_np, 1.0)))

    sl1_tl = jnp.sum(p[:, 4])
    sl1_br = jnp.sum(p[:, 5])
    mask_total = jnp.sum(p[:, 6])
    pull_loss = jnp.sum(p[:, 7])
    push_loss = jnp.sum(p[:, 8])

    num = mask_total * 2.0
    offset_loss = (sl1_tl / num) * REGR_WEIGHT + (sl1_br / num) * REGR_WEIGHT
    total = heat_loss + offset_loss + pull_loss + push_loss
    return total / B


def reference_loss(outs, targets):
    """Pure-JAX replica of the PyTorch forward (for validation)."""
    tl_heat, br_heat, tl_tag, br_tag, tl_regr, br_regr = outs
    (tl_heat_gt, br_heat_gt, tl_tag_gt, br_tag_gt,
     tl_regr_gt, br_regr_gt, tag_mask) = targets
    B = tl_heat.shape[0]
    eps = 1e-4

    def sig(x):
        return 1.0 / (1.0 + jnp.exp(-x))

    def focal(heat, gt):
        p = sig(heat)
        pos = gt == 1.0
        neg = gt < 1.0
        pos_l = jnp.sum(jnp.where(pos, jnp.log(p) * (1 - p) ** 2, 0.0), axis=(1, 2, 3))
        neg_l = jnp.sum(jnp.where(neg, jnp.log(1 - p) * p ** 2 * (1 - gt) ** 4, 0.0),
                        axis=(1, 2, 3))
        n_pos = jnp.sum(pos.astype(jnp.float32), axis=(1, 2, 3))
        return jnp.sum(jnp.where(n_pos == 0, -neg_l,
                                 -(pos_l + neg_l) / jnp.maximum(n_pos, 1.0)))

    heat_loss = focal(tl_heat, tl_heat_gt) + focal(br_heat, br_heat_gt)

    def offset_l1(off, gt, mask):
        num = mask.sum() * 2.0
        d = off - gt
        ad = jnp.abs(d)
        per = jnp.where(ad < 1.0, 0.5 * d * d, ad - 0.5)
        return jnp.sum(per * mask[:, :, None]) / num

    tl_g = transpose_and_gather_feat(tl_regr, tl_tag_gt)
    br_g = transpose_and_gather_feat(br_regr, br_tag_gt)
    offset_loss = (offset_l1(tl_g, tl_regr_gt, tag_mask)
                   + offset_l1(br_g, br_regr_gt, tag_mask)) * REGR_WEIGHT

    t0 = transpose_and_gather_feat(tl_tag, tl_tag_gt)[..., 0]
    t1 = transpose_and_gather_feat(br_tag, br_tag_gt)[..., 0]
    num = tag_mask.sum(axis=1, keepdims=True)
    tmean = 0.5 * (t0 + t1)
    pull = (jnp.sum((t0 - tmean) ** 2 / (num + eps) * tag_mask)
            + jnp.sum((t1 - tmean) ** 2 / (num + eps) * tag_mask))
    pair_mask = (tag_mask[:, :, None] + tag_mask[:, None, :]) == 2.0
    dist = 2.0 - jnp.abs(tmean[:, None, :] - tmean[:, :, None])
    dist = jnp.maximum(dist, 0.0)
    dist = dist - 2.0 / (num[:, :, None] + eps)
    dist = dist / ((num[:, :, None] - 1.0) * num[:, :, None] + eps)
    push = jnp.sum(jnp.where(pair_mask, dist, 0.0))

    return (heat_loss + offset_loss + pull + push) / B


if __name__ == "__main__":
    key = jax.random.PRNGKey(0)
    ks = jax.random.split(key, 24)

    # ---------------- case 1: B=2, C=4, 16x16 maps, K=8 ----------------
    B, C, H, W, K = 2, 4, 16, 16, 8
    tl_heat = jax.random.normal(ks[0], (B, C, H, W), jnp.float32)
    br_heat = jax.random.normal(ks[1], (B, C, H, W), jnp.float32)
    tl_heat_gt = 0.9 * jax.random.uniform(ks[2], (B, C, H, W), dtype=jnp.float32)
    br_heat_gt = 0.9 * jax.random.uniform(ks[3], (B, C, H, W), dtype=jnp.float32)
    # plant exact-1.0 positives; br batch 1 left without positives (num_pos == 0 branch)
    tl_heat_gt = (tl_heat_gt.at[0, 0, 3, 5].set(1.0)
                            .at[0, 2, 7, 9].set(1.0)
                            .at[1, 1, 4, 4].set(1.0))
    br_heat_gt = br_heat_gt.at[0, 1, 2, 2].set(1.0)

    tl_tag = jax.random.normal(ks[4], (B, 1, H, W), jnp.float32)
    br_tag = jax.random.normal(ks[5], (B, 1, H, W), jnp.float32)
    tl_regr = jax.random.normal(ks[6], (B, 2, H, W), jnp.float32)
    br_regr = jax.random.normal(ks[7], (B, 2, H, W), jnp.float32)
    tl_tag_gt = jax.random.randint(ks[8], (B, K), 0, H * W, dtype=jnp.int32)
    br_tag_gt = jax.random.randint(ks[9], (B, K), 0, H * W, dtype=jnp.int32)
    tl_regr_gt = jax.random.uniform(ks[10], (B, K, 2), dtype=jnp.float32)
    br_regr_gt = jax.random.uniform(ks[11], (B, K, 2), dtype=jnp.float32)
    tag_mask = jnp.array([[1, 1, 1, 0, 0, 0, 0, 0],
                          [1, 1, 1, 1, 1, 0, 0, 0]], jnp.float32)

    outs = (tl_heat, br_heat, tl_tag, br_tag, tl_regr, br_regr)
    targets = (tl_heat_gt, br_heat_gt, tl_tag_gt, br_tag_gt,
               tl_regr_gt, br_regr_gt, tag_mask)

    ref32 = jax.block_until_ready(reference_loss(outs, targets))

    # exact-f32 streams, 2 HW tiles (exercises the cross-tile accumulator)
    l_f32 = jax.block_until_ready(
        cornernet_loss(outs, targets, heat_dtype=None, tile_hw=128))
    # same but with the extra parallel HW-split axis (dual-TC path on v7x)
    l_f32_split = jax.block_until_ready(
        cornernet_loss(outs, targets, heat_dtype=None, tile_hw=128, hw_splits=2))
    # default: bf16 heat streams + auto tile; compared against the reference on the
    # identically-rounded heat maps (in-kernel math is f32 either way)
    outs_r, targets_r = _heat_rounded_inputs(outs, targets, jnp.bfloat16)
    ref_bf16 = jax.block_until_ready(reference_loss(outs_r, targets_r))
    l_bf16 = jax.block_until_ready(cornernet_loss(outs, targets))

    assert bool(jnp.isfinite(l_f32)) and bool(jnp.isfinite(l_bf16)), (l_f32, l_bf16)
    assert bool(jnp.allclose(l_f32, ref32, rtol=1e-3, atol=1e-3)), (l_f32, ref32)
    assert bool(jnp.allclose(l_f32_split, ref32, rtol=1e-3, atol=1e-3)), (l_f32_split, ref32)
    assert bool(jnp.allclose(l_bf16, ref_bf16, rtol=1e-3, atol=1e-3)), (l_bf16, ref_bf16)
    # bf16 streaming keeps the loss value close to the full-f32 one
    assert bool(jnp.allclose(l_bf16, ref32, rtol=5e-2, atol=5e-2)), (l_bf16, ref32)

    # ---------------- case 2: odd H*W (lane-padding path), B=1 ----------------
    B2, C2, H2, W2, K2 = 1, 3, 13, 9, 4            # H*W = 117 -> padded to 128
    tl_heat2 = jax.random.normal(ks[12], (B2, C2, H2, W2), jnp.float32)
    br_heat2 = jax.random.normal(ks[13], (B2, C2, H2, W2), jnp.float32)
    tl_hg2 = 0.9 * jax.random.uniform(ks[14], (B2, C2, H2, W2), dtype=jnp.float32)
    br_hg2 = 0.9 * jax.random.uniform(ks[15], (B2, C2, H2, W2), dtype=jnp.float32)
    tl_hg2 = tl_hg2.at[0, 1, 5, 3].set(1.0)        # br left with zero positives
    tl_tag2 = jax.random.normal(ks[16], (B2, 1, H2, W2), jnp.float32)
    br_tag2 = jax.random.normal(ks[17], (B2, 1, H2, W2), jnp.float32)
    tl_regr2 = jax.random.normal(ks[18], (B2, 2, H2, W2), jnp.float32)
    br_regr2 = jax.random.normal(ks[19], (B2, 2, H2, W2), jnp.float32)
    tl_ti2 = jax.random.randint(ks[20], (B2, K2), 0, H2 * W2, dtype=jnp.int32)
    br_ti2 = jax.random.randint(ks[21], (B2, K2), 0, H2 * W2, dtype=jnp.int32)
    tl_rg2 = jax.random.uniform(ks[22], (B2, K2, 2), dtype=jnp.float32)
    br_rg2 = jax.random.uniform(ks[23], (B2, K2, 2), dtype=jnp.float32)
    mask2 = jnp.array([[1, 1, 0, 0]], jnp.float32)

    outs2 = (tl_heat2, br_heat2, tl_tag2, br_tag2, tl_regr2, br_regr2)
    targets2 = (tl_hg2, br_hg2, tl_ti2, br_ti2, tl_rg2, br_rg2, mask2)

    ref2 = jax.block_until_ready(reference_loss(outs2, targets2))
    l2 = jax.block_until_ready(cornernet_loss(outs2, targets2, heat_dtype=None))
    assert bool(jnp.allclose(l2, ref2, rtol=1e-3, atol=1e-3)), (l2, ref2)

    print("KERNEL_OK")
</pallas_src>

<mosaic_0001>
module attributes {stable_mosaic.version = 11 : i64} {
  func.func @_loss_kernel(%arg0: i32, %arg1: i32, %arg2: i32, %arg3: memref<1x4x128xf32, #tpu.memory_space<vmem>>, %arg4: memref<1x4x128xf32, #tpu.memory_space<vmem>>, %arg5: memref<1x4x128xf32, #tpu.memory_space<vmem>>, %arg6: memref<1x4x128xf32, #tpu.memory_space<vmem>>, %arg7: memref<1x8x8xf32, #tpu.memory_space<vmem>>, %arg8: memref<1x3x8xf32, #tpu.memory_space<vmem>>, %arg9: memref<1x1x1x128xf32, #tpu.memory_space<vmem>>, %arg10: memref<4x4x128xf32, #tpu.memory_space<vmem>>) attributes {dimension_semantics = [#tpu.dimension_semantics<parallel>, #tpu.dimension_semantics<parallel>, #tpu.dimension_semantics<arbitrary>], iteration_bounds = array<i64: 2, 1, 2>, scalar_prefetch = 0 : i64, scratch_operands = 1 : i64, tpu.core_type = #tpu.core_type<tc>, window_params = [{transform_indices = @transform_0, window_bounds = array<i64: 1, 4, 128>}, {transform_indices = @transform_1, window_bounds = array<i64: 1, 4, 128>}, {transform_indices = @transform_2, window_bounds = array<i64: 1, 4, 128>}, {transform_indices = @transform_3, window_bounds = array<i64: 1, 4, 128>}, {transform_indices = @transform_4, window_bounds = array<i64: 1, 8, 8>}, {transform_indices = @transform_5, window_bounds = array<i64: 1, 3, 8>}, {transform_indices = @transform_6, window_bounds = array<i64: 1, 1, 1, 128>}]} {
    %c0_i32 = arith.constant 0 : i32
    %0 = arith.cmpi eq, %arg2, %c0_i32 : i32
    %1 = arith.extui %0 : i1 to i32
    %c0_i32_0 = arith.constant 0 : i32
    %2 = arith.cmpi ne, %1, %c0_i32_0 : i32
    scf.if %2 {
      %cst_51 = arith.constant 0.000000e+00 : f32
      %102 = vector.broadcast %cst_51 : f32 to vector<4x4x128xf32>
      %c0_52 = arith.constant 0 : index
      %c0_53 = arith.constant 0 : index
      %c0_54 = arith.constant 0 : index
      %103 = vector.load %arg10[%c0_52, %c0_53, %c0_54] : memref<4x4x128xf32, #tpu.memory_space<vmem>>, vector<4x4x128xf32>
      tpu.vector_store %arg10[%c0_52, %c0_53, %c0_54], %102 {strides = array<i32>} : memref<4x4x128xf32, #tpu.memory_space<vmem>>, vector<4x4x128xf32>,
    } else {
    }
    %c0 = arith.constant 0 : index
    %c0_1 = arith.constant 0 : index
    %c0_2 = arith.constant 0 : index
    %3 = vector.load %arg3[%c0, %c0_1, %c0_2] : memref<1x4x128xf32, #tpu.memory_space<vmem>>, vector<1x4x128xf32>
    %4 = vector.shape_cast %3 : vector<1x4x128xf32> to vector<4x128xf32>
    %c0_3 = arith.constant 0 : index
    %c0_4 = arith.constant 0 : index
    %c0_5 = arith.constant 0 : index
    %5 = vector.load %arg5[%c0_3, %c0_4, %c0_5] : memref<1x4x128xf32, #tpu.memory_space<vmem>>, vector<1x4x128xf32>
    %6 = vector.shape_cast %5 : vector<1x4x128xf32> to vector<4x128xf32>
    %7 = math.absf %4 : vector<4x128xf32>
    %cst = arith.constant 0.000000e+00 : f32
    %8 = vector.broadcast %cst : f32 to vector<4x128xf32>
    %9 = arith.subf %8, %7 : vector<4x128xf32>
    %10 = math.exp %9 : vector<4x128xf32>
    %cst_6 = arith.constant 1.000000e+00 : f32
    %11 = vector.broadcast %cst_6 : f32 to vector<4x128xf32>
    %12 = arith.addf %11, %10 : vector<4x128xf32>
    %13 = math.log %12 : vector<4x128xf32>
    %cst_7 = arith.constant 0.000000e+00 : f32
    %14 = vector.broadcast %cst_7 : f32 to vector<4x128xf32>
    %15 = arith.minimumf %4, %14 : vector<4x128xf32>
    %16 = arith.subf %15, %13 : vector<4x128xf32>
    %cst_8 = arith.constant 0.000000e+00 : f32
    %17 = vector.broadcast %cst_8 : f32 to vector<4x128xf32>
    %18 = arith.maximumf %4, %17 : vector<4x128xf32>
    %cst_9 = arith.constant 0.000000e+00 : f32
    %19 = vector.broadcast %cst_9 : f32 to vector<4x128xf32>
    %20 = arith.subf %19, %18 : vector<4x128xf32>
    %21 = arith.subf %20, %13 : vector<4x128xf32>
    %22 = math.exp %16 : vector<4x128xf32>
    %23 = math.exp %21 : vector<4x128xf32>
    %cst_10 = arith.constant 1.000000e+00 : f32
    %24 = vector.broadcast %cst_10 : f32 to vector<4x128xf32>
    %25 = arith.cmpf oeq, %6, %24 : vector<4x128xf32>
    %cst_11 = arith.constant 1.000000e+00 : f32
    %26 = vector.broadcast %cst_11 : f32 to vector<4x128xf32>
    %27 = arith.subf %26, %6 : vector<4x128xf32>
    %28 = arith.mulf %27, %27 : vector<4x128xf32>
    %29 = arith.mulf %28, %28 : vector<4x128xf32>
    %30 = arith.mulf %16, %23 : vector<4x128xf32>
    %31 = arith.mulf %30, %23 : vector<4x128xf32>
    %32 = arith.mulf %21, %22 : vector<4x128xf32>
    %33 = arith.mulf %32, %22 : vector<4x128xf32>
    %34 = arith.mulf %33, %29 : vector<4x128xf32>
    %35 = arith.select %25, %31, %34 : vector<4x128xi1>, vector<4x128xf32>
    %cst_12 = arith.constant 1.000000e+00 : f32
    %cst_13 = arith.constant 0.000000e+00 : f32
    %36 = vector.broadcast %cst_12 : f32 to vector<4x128xf32>
    %37 = vector.broadcast %cst_13 : f32 to vector<4x128xf32>
    %38 = arith.select %25, %36, %37 : vector<4x128xi1>, vector<4x128xf32>
    %c0_14 = arith.constant 0 : index
    %c0_15 = arith.constant 0 : index
    %c0_16 = arith.constant 0 : index
    %39 = vector.load %arg4[%c0_14, %c0_15, %c0_16] : memref<1x4x128xf32, #tpu.memory_space<vmem>>, vector<1x4x128xf32>
    %40 = vector.shape_cast %39 : vector<1x4x128xf32> to vector<4x128xf32>
    %c0_17 = arith.constant 0 : index
    %c0_18 = arith.constant 0 : index
    %c0_19 = arith.constant 0 : index
    %41 = vector.load %arg6[%c0_17, %c0_18, %c0_19] : memref<1x4x128xf32, #tpu.memory_space<vmem>>, vector<1x4x128xf32>
    %42 = vector.shape_cast %41 : vector<1x4x128xf32> to vector<4x128xf32>
    %43 = math.absf %40 : vector<4x128xf32>
    %cst_20 = arith.constant 0.000000e+00 : f32
    %44 = vector.broadcast %cst_20 : f32 to vector<4x128xf32>
    %45 = arith.subf %44, %43 : vector<4x128xf32>
    %46 = math.exp %45 : vector<4x128xf32>
    %cst_21 = arith.constant 1.000000e+00 : f32
    %47 = vector.broadcast %cst_21 : f32 to vector<4x128xf32>
    %48 = arith.addf %47, %46 : vector<4x128xf32>
    %49 = math.log %48 : vector<4x128xf32>
    %cst_22 = arith.constant 0.000000e+00 : f32
    %50 = vector.broadcast %cst_22 : f32 to vector<4x128xf32>
    %51 = arith.minimumf %40, %50 : vector<4x128xf32>
    %52 = arith.subf %51, %49 : vector<4x128xf32>
    %cst_23 = arith.constant 0.000000e+00 : f32
    %53 = vector.broadcast %cst_23 : f32 to vector<4x128xf32>
    %54 = arith.maximumf %40, %53 : vector<4x128xf32>
    %cst_24 = arith.constant 0.000000e+00 : f32
    %55 = vector.broadcast %cst_24 : f32 to vector<4x128xf32>
    %56 = arith.subf %55, %54 : vector<4x128xf32>
    %57 = arith.subf %56, %49 : vector<4x128xf32>
    %58 = math.exp %52 : vector<4x128xf32>
    %59 = math.exp %57 : vector<4x128xf32>
    %cst_25 = arith.constant 1.000000e+00 : f32
    %60 = vector.broadcast %cst_25 : f32 to vector<4x128xf32>
    %61 = arith.cmpf oeq, %42, %60 : vector<4x128xf32>
    %cst_26 = arith.constant 1.000000e+00 : f32
    %62 = vector.broadcast %cst_26 : f32 to vector<4x128xf32>
    %63 = arith.subf %62, %42 : vector<4x128xf32>
    %64 = arith.mulf %63, %63 : vector<4x128xf32>
    %65 = arith.mulf %64, %64 : vector<4x128xf32>
    %66 = arith.mulf %52, %59 : vector<4x128xf32>
    %67 = arith.mulf %66, %59 : vector<4x128xf32>
    %68 = arith.mulf %57, %58 : vector<4x128xf32>
    %69 = arith.mulf %68, %58 : vector<4x128xf32>
    %70 = arith.mulf %69, %65 : vector<4x128xf32>
    %71 = arith.select %61, %67, %70 : vector<4x128xi1>, vector<4x128xf32>
    %cst_27 = arith.constant 1.000000e+00 : f32
    %cst_28 = arith.constant 0.000000e+00 : f32
    %72 = vector.broadcast %cst_27 : f32 to vector<4x128xf32>
    %73 = vector.broadcast %cst_28 : f32 to vector<4x128xf32>
    %74 = arith.select %61, %72, %73 : vector<4x128xi1>, vector<4x128xf32>
    %c0_29 = arith.constant 0 : index
    %c0_30 = arith.constant 0 : index
    %c0_31 = arith.constant 0 : index
    %75 = vector.load %arg10[%c0_29, %c0_30, %c0_31] : memref<4x4x128xf32, #tpu.memory_space<vmem>>, vector<1x4x128xf32>
    %76 = vector.shape_cast %75 : vector<1x4x128xf32> to vector<4x128xf32>
    %77 = arith.addf %76, %35 : vector<4x128xf32>
    %c0_32 = arith.constant 0 : index
    %c0_33 = arith.constant 0 : index
    %c0_34 = arith.constant 0 : index
    %78 = vector.load %arg10[%c0_32, %c0_33, %c0_34] : memref<4x4x128xf32, #tpu.memory_space<vmem>>, vector<1x4x128xf32>
    %79 = vector.shape_cast %78 : vector<1x4x128xf32> to vector<4x128xf32>
    %80 = vector.shape_cast %77 : vector<4x128xf32> to vector<1x4x128xf32>
    tpu.vector_store %arg10[%c0_32, %c0_33, %c0_34], %80 {strides = array<i32>} : memref<4x4x128xf32, #tpu.memory_space<vmem>>, vector<1x4x128xf32>,
    %c1 = arith.constant 1 : index
    %c0_35 = arith.constant 0 : index
    %c0_36 = arith.constant 0 : index
    %81 = vector.load %arg10[%c1, %c0_35, %c0_36] : memref<4x4x128xf32, #tpu.memory_space<vmem>>, vector<1x4x128xf32>
    %82 = vector.shape_cast %81 : vector<1x4x128xf32> to vector<4x128xf32>
    %83 = arith.addf %82, %38 : vector<4x128xf32>
    %c1_37 = arith.constant 1 : index
    %c0_38 = arith.constant 0 : index
    %c0_39 = arith.constant 0 : index
    %84 = vector.load %arg10[%c1_37, %c0_38, %c0_39] : memref<4x4x128xf32, #tpu.memory_space<vmem>>, vector<1x4x128xf32>
    %85 = vector.shape_cast %84 : vector<1x4x128xf32> to vector<4x128xf32>
    %86 = vector.shape_cast %83 : vector<4x128xf32> to vector<1x4x128xf32>
    tpu.vector_store %arg10[%c1_37, %c0_38, %c0_39], %86 {strides = array<i32>} : memref<4x4x128xf32, #tpu.memory_space<vmem>>, vector<1x4x128xf32>,
    %c2 = arith.constant 2 : index
    %c0_40 = arith.constant 0 : index
    %c0_41 = arith.constant 0 : index
    %87 = vector.load %arg10[%c2, %c0_40, %c0_41] : memref<4x4x128xf32, #tpu.memory_space<vmem>>, vector<1x4x128xf32>
    %88 = vector.shape_cast %87 : vector<1x4x128xf32> to vector<4x128xf32>
    %89 = arith.addf %88, %71 : vector<4x128xf32>
    %c2_42 = arith.constant 2 : index
    %c0_43 = arith.constant 0 : index
    %c0_44 = arith.constant 0 : index
    %90 = vector.load %arg10[%c2_42, %c0_43, %c0_44] : memref<4x4x128xf32, #tpu.memory_space<vmem>>, vector<1x4x128xf32>
    %91 = vector.shape_cast %90 : vector<1x4x128xf32> to vector<4x128xf32>
    %92 = vector.shape_cast %89 : vector<4x128xf32> to vector<1x4x128xf32>
    tpu.vector_store %arg10[%c2_42, %c0_43, %c0_44], %92 {strides = array<i32>} : memref<4x4x128xf32, #tpu.memory_space<vmem>>, vector<1x4x128xf32>,
    %c3 = arith.constant 3 : index
    %c0_45 = arith.constant 0 : index
    %c0_46 = arith.constant 0 : index
    %93 = vector.load %arg10[%c3, %c0_45, %c0_46] : memref<4x4x128xf32, #tpu.memory_space<vmem>>, vector<1x4x128xf32>
    %94 = vector.shape_cast %93 : vector<1x4x128xf32> to vector<4x128xf32>
    %95 = arith.addf %94, %74 : vector<4x128xf32>
    %c3_47 = arith.constant 3 : index
    %c0_48 = arith.constant 0 : index
    %c0_49 = arith.constant 0 : index
    %96 = vector.load %arg10[%c3_47, %c0_48, %c0_49] : memref<4x4x128xf32, #tpu.memory_space<vmem>>, vector<1x4x128xf32>
    %97 = vector.shape_cast %96 : vector<1x4x128xf32> to vector<4x128xf32>
    %98 = vector.shape_cast %95 : vector<4x128xf32> to vector<1x4x128xf32>
    tpu.vector_store %arg10[%c3_47, %c0_48, %c0_49], %98 {strides = array<i32>} : memref<4x4x128xf32, #tpu.memory_space<vmem>>, vector<1x4x128xf32>,
    %c1_i32 = arith.constant 1 : i32
    %99 = arith.cmpi eq, %arg2, %c1_i32 : i32
    %100 = arith.extui %99 : i1 to i32
    %c0_i32_50 = arith.constant 0 : i32
    %101 = arith.cmpi ne, %100, %c0_i32_50 : i32
    scf.if %101 {
      %102 = tpu.iota {dimensions = array<i32: 1>} : vector<1x128xi32>
      %c0_51 = arith.constant 0 : index
      %c0_52 = arith.constant 0 : index
      %c0_53 = arith.constant 0 : index
      %103 = vector.load %arg10[%c0_51, %c0_52, %c0_53] : memref<4x4x128xf32, #tpu.memory_space<vmem>>, vector<1x4x128xf32>
      %104 = vector.shape_cast %103 : vector<1x4x128xf32> to vector<4x128xf32>
      %105 = vector.shape_cast %104 : vector<4x128xf32> to vector<1x4x128xf32>
      %cst_54 = arith.constant dense<0.000000e+00> : vector<1xf32>
      %106 = vector.multi_reduction <add>, %105, %cst_54 [1, 2] : vector<1x4x128xf32> to vector<1xf32>
      %107 = vector.shape_cast %106 : vector<1xf32> to vector<1x1x1xf32>
      %108 = vector.extract %107[0, 0, 0] : f32 from vector<1x1x1xf32>
      %c1_55 = arith.constant 1 : index
      %c0_56 = arith.constant 0 : index
      %c0_57 = arith.constant 0 : index
      %109 = vector.load %arg10[%c1_55, %c0_56, %c0_57] : memref<4x4x128xf32, #tpu.memory_space<vmem>>, vector<1x4x128xf32>
      %110 = vector.shape_cast %109 : vector<1x4x128xf32> to vector<4x128xf32>
      %111 = vector.shape_cast %110 : vector<4x128xf32> to vector<1x4x128xf32>
      %cst_58 = arith.constant dense<0.000000e+00> : vector<1xf32>
      %112 = vector.multi_reduction <add>, %111, %cst_58 [1, 2] : vector<1x4x128xf32> to vector<1xf32>
      %113 = vector.shape_cast %112 : vector<1xf32> to vector<1x1x1xf32>
      %114 = vector.extract %113[0, 0, 0] : f32 from vector<1x1x1xf32>
      %c2_59 = arith.constant 2 : index
      %c0_60 = arith.constant 0 : index
      %c0_61 = arith.constant 0 : index
      %115 = vector.load %arg10[%c2_59, %c0_60, %c0_61] : memref<4x4x128xf32, #tpu.memory_space<vmem>>, vector<1x4x128xf32>
      %116 = vector.shape_cast %115 : vector<1x4x128xf32> to vector<4x128xf32>
      %117 = vector.shape_cast %116 : vector<4x128xf32> to vector<1x4x128xf32>
      %cst_62 = arith.constant dense<0.000000e+00> : vector<1xf32>
      %118 = vector.multi_reduction <add>, %117, %cst_62 [1, 2] : vector<1x4x128xf32> to vector<1xf32>
      %119 = vector.shape_cast %118 : vector<1xf32> to vector<1x1x1xf32>
      %120 = vector.extract %119[0, 0, 0] : f32 from vector<1x1x1xf32>
      %c3_63 = arith.constant 3 : index
      %c0_64 = arith.constant 0 : index
      %c0_65 = arith.constant 0 : index
      %121 = vector.load %arg10[%c3_63, %c0_64, %c0_65] : memref<4x4x128xf32, #tpu.memory_space<vmem>>, vector<1x4x128xf32>
      %122 = vector.shape_cast %121 : vector<1x4x128xf32> to vector<4x128xf32>
      %123 = vector.shape_cast %122 : vector<4x128xf32> to vector<1x4x128xf32>
      %cst_66 = arith.constant dense<0.000000e+00> : vector<1xf32>
      %124 = vector.multi_reduction <add>, %123, %cst_66 [1, 2] : vector<1x4x128xf32> to vector<1xf32>
      %125 = vector.shape_cast %124 : vector<1xf32> to vector<1x1x1xf32>
      %126 = vector.extract %125[0, 0, 0] : f32 from vector<1x1x1xf32>
      %c0_67 = arith.constant 0 : index
      %c0_68 = arith.constant 0 : index
      %c0_69 = arith.constant 0 : index
      %127 = vector.load %arg7[%c0_67, %c0_68, %c0_69] : memref<1x8x8xf32, #tpu.memory_space<vmem>>, vector<1x8x8xf32>
      %128 = vector.shape_cast %127 : vector<1x8x8xf32> to vector<8x8xf32>
      %c0_70 = arith.constant 0 : index
      %c0_71 = arith.constant 0 : index
      %c0_72 = arith.constant 0 : index
      %129 = vector.load %arg8[%c0_70, %c0_71, %c0_72] : memref<1x3x8xf32, #tpu.memory_space<vmem>>, vector<1x3x8xf32>
      %130 = vector.shape_cast %129 : vector<1x3x8xf32> to vector<3x8xf32>
      %131 = vector.extract_strided_slice %130 {offsets = [2, 0], sizes = [1, 8], strides = [1, 1]} : vector<3x8xf32> to vector<1x8xf32>
      %132 = vector.extract_strided_slice %128 {offsets = [0, 0], sizes = [2, 8], strides = [1, 1]} : vector<8x8xf32> to vector<2x8xf32>
      %133 = vector.extract_strided_slice %128 {offsets = [2, 0], sizes = [2, 8], strides = [1, 1]} : vector<8x8xf32> to vector<2x8xf32>
      %134 = arith.subf %132, %133 : vector<2x8xf32>
      %135 = math.absf %134 : vector<2x8xf32>
      %cst_73 = arith.constant 1.000000e+00 : f32
      %136 = vector.broadcast %cst_73 : f32 to vector<2x8xf32>
      %137 = arith.cmpf olt, %135, %136 : vector<2x8xf32>
      %cst_74 = arith.constant 5.000000e-01 : f32
      %138 = vector.broadcast %cst_74 : f32 to vector<2x8xf32>
      %139 = arith.mulf %138, %134 : vector<2x8xf32>
      %140 = arith.mulf %139, %134 : vector<2x8xf32>
      %cst_75 = arith.constant 5.000000e-01 : f32
      %141 = vector.broadcast %cst_75 : f32 to vector<2x8xf32>
      %142 = arith.subf %135, %141 : vector<2x8xf32>
      %143 = arith.select %137, %140, %142 : vector<2x8xi1>, vector<2x8xf32>
      %144 = vector.broadcast %131 : vector<1x8xf32> to vector<2x8xf32>
      %145 = arith.mulf %143, %144 : vector<2x8xf32>
      %146 = vector.shape_cast %145 : vector<2x8xf32> to vector<1x2x8xf32>
      %cst_76 = arith.constant dense<0.000000e+00> : vector<1xf32>
      %147 = vector.multi_reduction <add>, %146, %cst_76 [1, 2] : vector<1x2x8xf32> to vector<1xf32>
      %148 = vector.shape_cast %147 : vector<1xf32> to vector<1x1x1xf32>
      %149 = vector.extract %148[0, 0, 0] : f32 from vector<1x1x1xf32>
      %150 = vector.extract_strided_slice %128 {offsets = [4, 0], sizes = [2, 8], strides = [1, 1]} : vector<8x8xf32> to vector<2x8xf32>
      %151 = vector.extract_strided_slice %128 {offsets = [6, 0], sizes = [2, 8], strides = [1, 1]} : vector<8x8xf32> to vector<2x8xf32>
      %152 = arith.subf %150, %151 : vector<2x8xf32>
      %153 = math.absf %152 : vector<2x8xf32>
      %cst_77 = arith.constant 1.000000e+00 : f32
      %154 = vector.broadcast %cst_77 : f32 to vector<2x8xf32>
      %155 = arith.cmpf olt, %153, %154 : vector<2x8xf32>
      %cst_78 = arith.constant 5.000000e-01 : f32
      %156 = vector.broadcast %cst_78 : f32 to vector<2x8xf32>
      %157 = arith.mulf %156, %152 : vector<2x8xf32>
      %158 = arith.mulf %157, %152 : vector<2x8xf32>
      %cst_79 = arith.constant 5.000000e-01 : f32
      %159 = vector.broadcast %cst_79 : f32 to vector<2x8xf32>
      %160 = arith.subf %153, %159 : vector<2x8xf32>
      %161 = arith.select %155, %158, %160 : vector<2x8xi1>, vector<2x8xf32>
      %162 = vector.broadcast %131 : vector<1x8xf32> to vector<2x8xf32>
      %163 = arith.mulf %161, %162 : vector<2x8xf32>
      %164 = vector.shape_cast %163 : vector<2x8xf32> to vector<1x2x8xf32>
      %cst_80 = arith.constant dense<0.000000e+00> : vector<1xf32>
      %165 = vector.multi_reduction <add>, %164, %cst_80 [1, 2] : vector<1x2x8xf32> to vector<1xf32>
      %166 = vector.shape_cast %165 : vector<1xf32> to vector<1x1x1xf32>
      %167 = vector.extract %166[0, 0, 0] : f32 from vector<1x1x1xf32>
      %168 = vector.shape_cast %131 : vector<1x8xf32> to vector<1x1x8xf32>
      %cst_81 = arith.constant dense<0.000000e+00> : vector<1xf32>
      %169 = vector.multi_reduction <add>, %168, %cst_81 [1, 2] : vector<1x1x8xf32> to vector<1xf32>
      %170 = vector.shape_cast %169 : vector<1xf32> to vector<1x1x1xf32>
      %171 = vector.extract %170[0, 0, 0] : f32 from vector<1x1x1xf32>
      %172 = vector.extract_strided_slice %130 {offsets = [0, 0], sizes = [1, 8], strides = [1, 1]} : vector<3x8xf32> to vector<1x8xf32>
      %173 = vector.extract_strided_slice %130 {offsets = [1, 0], sizes = [1, 8], strides = [1, 1]} : vector<3x8xf32> to vector<1x8xf32>
      %174 = arith.addf %172, %173 : vector<1x8xf32>
      %cst_82 = arith.constant 5.000000e-01 : f32
      %175 = vector.broadcast %cst_82 : f32 to vector<1x8xf32>
      %176 = arith.mulf %175, %174 : vector<1x8xf32>
      %cst_83 = arith.constant 9.99999974E-5 : f32
      %177 = arith.addf %171, %cst_83 : f32
      %cst_84 = arith.constant 1.000000e+00 : f32
      %178 = arith.divf %cst_84, %177 : f32
      %179 = arith.subf %172, %176 : vector<1x8xf32>
      %180 = arith.mulf %179, %179 : vector<1x8xf32>
      %181 = arith.subf %173, %176 : vector<1x8xf32>
      %182 = arith.mulf %181, %181 : vector<1x8xf32>
      %183 = arith.addf %180, %182 : vector<1x8xf32>
      %184 = vector.broadcast %178 : f32 to vector<1x8xf32>
      %185 = arith.mulf %183, %184 : vector<1x8xf32>
      %186 = arith.mulf %185, %131 : vector<1x8xf32>
      %187 = vector.shape_cast %186 : vector<1x8xf32> to vector<1x1x8xf32>
      %cst_85 = arith.constant dense<0.000000e+00> : vector<1xf32>
      %188 = vector.multi_reduction <add>, %187, %cst_85 [1, 2] : vector<1x1x8xf32> to vector<1xf32>
      %189 = vector.shape_cast %188 : vector<1xf32> to vector<1x1x1xf32>
      %190 = vector.extract %189[0, 0, 0] : f32 from vector<1x1x1xf32>
      %191 = tpu.transpose %130, [1, 0] : vector<3x8xf32> -> vector<8x3xf32>
      %192 = vector.extract_strided_slice %191 {offsets = [0, 0], sizes = [8, 1], strides = [1, 1]} : vector<8x3xf32> to vector<8x1xf32>
      %193 = vector.extract_strided_slice %191 {offsets = [0, 1], sizes = [8, 1], strides = [1, 1]} : vector<8x3xf32> to vector<8x1xf32>
      %194 = arith.addf %192, %193 : vector<8x1xf32>
      %cst_86 = arith.constant 5.000000e-01 : f32
      %195 = vector.broadcast %cst_86 : f32 to vector<8x1xf32>
      %196 = arith.mulf %195, %194 : vector<8x1xf32>
      %197 = vector.extract_strided_slice %191 {offsets = [0, 2], sizes = [8, 1], strides = [1, 1]} : vector<8x3xf32> to vector<8x1xf32>
      %198 = vector.broadcast %197 : vector<8x1xf32> to vector<8x8xf32>
      %199 = vector.broadcast %131 : vector<1x8xf32> to vector<8x8xf32>
      %200 = arith.addf %198, %199 : vector<8x8xf32>
      %cst_87 = arith.constant 2.000000e+00 : f32
      %201 = vector.broadcast %cst_87 : f32 to vector<8x8xf32>
      %202 = arith.cmpf oeq, %200, %201 : vector<8x8xf32>
      %203 = vector.broadcast %196 : vector<8x1xf32> to vector<8x8xf32>
      %204 = vector.broadcast %176 : vector<1x8xf32> to vector<8x8xf32>
      %205 = arith.subf %203, %204 : vector<8x8xf32>
      %206 = math.absf %205 : vector<8x8xf32>
      %cst_88 = arith.constant 2.000000e+00 : f32
      %207 = vector.broadcast %cst_88 : f32 to vector<8x8xf32>
      %208 = arith.subf %207, %206 : vector<8x8xf32>
      %cst_89 = arith.constant 0.000000e+00 : f32
      %209 = vector.broadcast %cst_89 : f32 to vector<8x8xf32>
      %210 = arith.maximumf %208, %209 : vector<8x8xf32>
      %cst_90 = arith.constant 2.000000e+00 : f32
      %211 = arith.mulf %cst_90, %178 : f32
      %212 = vector.broadcast %211 : f32 to vector<8x8xf32>
      %213 = arith.subf %210, %212 : vector<8x8xf32>
      %cst_91 = arith.constant 1.000000e+00 : f32
      %214 = arith.subf %171, %cst_91 : f32
      %215 = arith.mulf %214, %171 : f32
      %cst_92 = arith.constant 9.99999974E-5 : f32
      %216 = arith.addf %215, %cst_92 : f32
      %217 = vector.broadcast %216 : f32 to vector<8x8xf32>
      %218 = arith.divf %213, %217 : vector<8x8xf32>
      %cst_93 = arith.constant 0.000000e+00 : f32
      %219 = vector.broadcast %cst_93 : f32 to vector<8x8xf32>
      %220 = arith.select %202, %218, %219 : vector<8x8xi1>, vector<8x8xf32>
      %221 = vector.shape_cast %220 : vector<8x8xf32> to vector<1x8x8xf32>
      %cst_94 = arith.constant dense<0.000000e+00> : vector<1xf32>
      %222 = vector.multi_reduction <add>, %221, %cst_94 [1, 2] : vector<1x8x8xf32> to vector<1xf32>
      %223 = vector.shape_cast %222 : vector<1xf32> to vector<1x1x1xf32>
      %224 = vector.extract %223[0, 0, 0] : f32 from vector<1x1x1xf32>
      %c0_i32_95 = arith.constant 0 : i32
      %225 = arith.cmpi eq, %arg1, %c0_i32_95 : i32
      %cst_96 = arith.constant 1.000000e+00 : f32
      %cst_97 = arith.constant 0.000000e+00 : f32
      %226 = arith.select %225, %cst_96, %cst_97 : f32
      %c0_i32_98 = arith.constant 0 : i32
      %227 = vector.broadcast %c0_i32_98 : i32 to vector<1x128xi32>
      %228 = arith.cmpi eq, %102, %227 : vector<1x128xi32>
      %cst_99 = arith.constant 0.000000e+00 : f32
      %229 = vector.broadcast %108 : f32 to vector<1x128xf32>
      %230 = vector.broadcast %cst_99 : f32 to vector<1x128xf32>
      %231 = arith.select %228, %229, %230 : vector<1x128xi1>, vector<1x128xf32>
      %c1_i32_100 = arith.constant 1 : i32
      %232 = vector.broadcast %c1_i32_100 : i32 to vector<1x128xi32>
      %233 = arith.cmpi eq, %102, %232 : vector<1x128xi32>
      %cst_101 = arith.constant 0.000000e+00 : f32
      %234 = vector.broadcast %114 : f32 to vector<1x128xf32>
      %235 = vector.broadcast %cst_101 : f32 to vector<1x128xf32>
      %236 = arith.select %233, %234, %235 : vector<1x128xi1>, vector<1x128xf32>
      %237 = arith.addf %231, %236 : vector<1x128xf32>
      %c2_i32 = arith.constant 2 : i32
      %238 = vector.broadcast %c2_i32 : i32 to vector<1x128xi32>
      %239 = arith.cmpi eq, %102, %238 : vector<1x128xi32>
      %cst_102 = arith.constant 0.000000e+00 : f32
      %240 = vector.broadcast %120 : f32 to vector<1x128xf32>
      %241 = vector.broadcast %cst_102 : f32 to vector<1x128xf32>
      %242 = arith.select %239, %240, %241 : vector<1x128xi1>, vector<1x128xf32>
      %243 = arith.addf %237, %242 : vector<1x128xf32>
      %c3_i32 = arith.constant 3 : i32
      %244 = vector.broadcast %c3_i32 : i32 to vector<1x128xi32>
      %245 = arith.cmpi eq, %102, %244 : vector<1x128xi32>
      %cst_103 = arith.constant 0.000000e+00 : f32
      %246 = vector.broadcast %126 : f32 to vector<1x128xf32>
      %247 = vector.broadcast %cst_103 : f32 to vector<1x128xf32>
      %248 = arith.select %245, %246, %247 : vector<1x128xi1>, vector<1x128xf32>
      %249 = arith.addf %243, %248 : vector<1x128xf32>
      %c4_i32 = arith.constant 4 : i32
      %250 = vector.broadcast %c4_i32 : i32 to vector<1x128xi32>
      %251 = arith.cmpi eq, %102, %250 : vector<1x128xi32>
      %cst_104 = arith.constant 0.000000e+00 : f32
      %252 = vector.broadcast %149 : f32 to vector<1x128xf32>
      %253 = vector.broadcast %cst_104 : f32 to vector<1x128xf32>
      %254 = arith.select %251, %252, %253 : vector<1x128xi1>, vector<1x128xf32>
      %c5_i32 = arith.constant 5 : i32
      %255 = vector.broadcast %c5_i32 : i32 to vector<1x128xi32>
      %256 = arith.cmpi eq, %102, %255 : vector<1x128xi32>
      %cst_105 = arith.constant 0.000000e+00 : f32
      %257 = vector.broadcast %167 : f32 to vector<1x128xf32>
      %258 = vector.broadcast %cst_105 : f32 to vector<1x128xf32>
      %259 = arith.select %256, %257, %258 : vector<1x128xi1>, vector<1x128xf32>
      %260 = arith.addf %254, %259 : vector<1x128xf32>
      %c6_i32 = arith.constant 6 : i32
      %261 = vector.broadcast %c6_i32 : i32 to vector<1x128xi32>
      %262 = arith.cmpi eq, %102, %261 : vector<1x128xi32>
      %cst_106 = arith.constant 0.000000e+00 : f32
      %263 = vector.broadcast %171 : f32 to vector<1x128xf32>
      %264 = vector.broadcast %cst_106 : f32 to vector<1x128xf32>
      %265 = arith.select %262, %263, %264 : vector<1x128xi1>, vector<1x128xf32>
      %266 = arith.addf %260, %265 : vector<1x128xf32>
      %c7_i32 = arith.constant 7 : i32
      %267 = vector.broadcast %c7_i32 : i32 to vector<1x128xi32>
      %268 = arith.cmpi eq, %102, %267 : vector<1x128xi32>
      %cst_107 = arith.constant 0.000000e+00 : f32
      %269 = vector.broadcast %190 : f32 to vector<1x128xf32>
      %270 = vector.broadcast %cst_107 : f32 to vector<1x128xf32>
      %271 = arith.select %268, %269, %270 : vector<1x128xi1>, vector<1x128xf32>
      %272 = arith.addf %266, %271 : vector<1x128xf32>
      %c8_i32 = arith.constant 8 : i32
      %273 = vector.broadcast %c8_i32 : i32 to vector<1x128xi32>
      %274 = arith.cmpi eq, %102, %273 : vector<1x128xi32>
      %cst_108 = arith.constant 0.000000e+00 : f32
      %275 = vector.broadcast %224 : f32 to vector<1x128xf32>
      %276 = vector.broadcast %cst_108 : f32 to vector<1x128xf32>
      %277 = arith.select %274, %275, %276 : vector<1x128xi1>, vector<1x128xf32>
      %278 = arith.addf %272, %277 : vector<1x128xf32>
      %279 = vector.broadcast %226 : f32 to vector<1x128xf32>
      %280 = arith.mulf %279, %278 : vector<1x128xf32>
      %281 = arith.addf %249, %280 : vector<1x128xf32>
      %c0_109 = arith.constant 0 : index
      %c0_110 = arith.constant 0 : index
      %c0_111 = arith.constant 0 : index
      %c0_112 = arith.constant 0 : index
      %282 = vector.load %arg9[%c0_109, %c0_110, %c0_111, %c0_112] : memref<1x1x1x128xf32, #tpu.memory_space<vmem>>, vector<1x1x1x128xf32>
      %283 = vector.shape_cast %282 : vector<1x1x1x128xf32> to vector<1x128xf32>
      %284 = vector.shape_cast %281 : vector<1x128xf32> to vector<1x1x1x128xf32>
      tpu.vector_store %arg9[%c0_109, %c0_110, %c0_111, %c0_112], %284 {strides = array<i32>} : memref<1x1x1x128xf32, #tpu.memory_space<vmem>>, vector<1x1x1x128xf32>,
    } else {
    }
    return
  }
  func.func @transform_0(%arg0: i32, %arg1: i32, %arg2: i32) -> (i32, i32, i32) {
    %c2_i32 = arith.constant 2 : i32
    %0 = arith.muli %arg1, %c2_i32 : i32
    %1 = arith.addi %0, %arg2 : i32
    %c0_i32 = arith.constant 0 : i32
    %c0_i32_0 = arith.constant 0 : i32
    return %arg0, %c0_i32, %1 : i32, i32, i32
  }
  func.func @transform_1(%arg0: i32, %arg1: i32, %arg2: i32) -> (i32, i32, i32) {
    %c2_i32 = arith.constant 2 : i32
    %0 = arith.muli %arg1, %c2_i32 : i32
    %1 = arith.addi %0, %arg2 : i32
    %c0_i32 = arith.constant 0 : i32
    %c0_i32_0 = arith.constant 0 : i32
    return %arg0, %c0_i32, %1 : i32, i32, i32
  }
  func.func @transform_2(%arg0: i32, %arg1: i32, %arg2: i32) -> (i32, i32, i32) {
    %c2_i32 = arith.constant 2 : i32
    %0 = arith.muli %arg1, %c2_i32 : i32
    %1 = arith.addi %0, %arg2 : i32
    %c0_i32 = arith.constant 0 : i32
    %c0_i32_0 = arith.constant 0 : i32
    return %arg0, %c0_i32, %1 : i32, i32, i32
  }
  func.func @transform_3(%arg0: i32, %arg1: i32, %arg2: i32) -> (i32, i32, i32) {
    %c2_i32 = arith.constant 2 : i32
    %0 = arith.muli %arg1, %c2_i32 : i32
    %1 = arith.addi %0, %arg2 : i32
    %c0_i32 = arith.constant 0 : i32
    %c0_i32_0 = arith.constant 0 : i32
    return %arg0, %c0_i32, %1 : i32, i32, i32
  }
  func.func @transform_4(%arg0: i32, %arg1: i32, %arg2: i32) -> (i32, i32, i32) {
    %c0_i32 = arith.constant 0 : i32
    %c0_i32_0 = arith.constant 0 : i32
    %c0_i32_1 = arith.constant 0 : i32
    return %arg0, %c0_i32, %c0_i32_0 : i32, i32, i32
  }
  func.func @transform_5(%arg0: i32, %arg1: i32, %arg2: i32) -> (i32, i32, i32) {
    %c0_i32 = arith.constant 0 : i32
    %c0_i32_0 = arith.constant 0 : i32
    %c0_i32_1 = arith.constant 0 : i32
    return %arg0, %c0_i32, %c0_i32_0 : i32, i32, i32
  }
  func.func @transform_6(%arg0: i32, %arg1: i32, %arg2: i32) -> (i32, i32, i32, i32) {
    %c0_i32 = arith.constant 0 : i32
    %c0_i32_0 = arith.constant 0 : i32
    %c0_i32_1 = arith.constant 0 : i32
    return %arg0, %arg1, %c0_i32, %c0_i32_0 : i32, i32, i32, i32
  }
}

</mosaic_0001>

<llo_original>
// kernel: tpu_custom_call.1
$region0: #{tpu_custom_call.1}
  #allocation0 [shape = 'u32[]', space=smem, size = 0x4, offset = 0x4, fixed_abs, tag = 'smem constant byte address 0x4 - core index']
  #allocation1 [shape = 'u32[144,128]{1,0:T(1,128)}', space=vmem, size = 0x12000, scoped, tag = 'internal scratch']
  #allocation2 [shape = 'f32[4,4,128]{2,1,0:T(4,128)}', space=vmem, size = 0x2000, scoped, tag = 'scratch operand']
  %s0 = inlined_call_operand.hbm [shape: f32[2,4,256], index: 0, kind: input, shape index: {}]
  %s1 = inlined_call_operand.vmem [shape: f32[2,4,256], index: 1, kind: input, shape index: {}]
  %s2 = inlined_call_operand.hbm [shape: f32[2,4,256], index: 2, kind: input, shape index: {}]
  %s3 = inlined_call_operand.hbm [shape: f32[2,4,256], index: 3, kind: input, shape index: {}]
  %s4 = inlined_call_operand.hbm [shape: f32[2,8,8], index: 4, kind: input, shape index: {}]
  %s5 = inlined_call_operand.vmem [shape: f32[2,3,8], index: 5, kind: input, shape index: {}]
  %s6 = inlined_call_operand.hbm [shape: f32[2,1,1,128], index: 6, kind: output, shape index: {}]
  %s7 = sld [smem:[#allocation0]]
  $region81: #{tpu_custom_call.1} parent=0
    _
  %s9 = ssub.s32 1, %s7
  %s10 = scalar_select 0, %s9, %s7
  $region1: #{tpu_custom_call.1} parent=0
    #allocation3 [shape = 'u8[4096]{0}', space=vmem, size = 0x1000, scoped, tag = 'input window, operand 0']
    #allocation4 [shape = 's32[2]{0}', space=sflag, size = 0x8, scoped, tag = 'scoped memory for tpu_custom_call.1']
    #allocation5 [shape = 's32[2]{0}', space=sflag, size = 0x8, scoped, tag = 'scoped memory for tpu_custom_call.1']
    #allocation6 [shape = 'u8[4096]{0}', space=vmem, size = 0x1000, scoped, tag = 'input window, operand 2']
    #allocation7 [shape = 's32[2]{0}', space=sflag, size = 0x8, scoped, tag = 'scoped memory for tpu_custom_call.1']
    #allocation8 [shape = 'u8[4096]{0}', space=vmem, size = 0x1000, scoped, tag = 'input window, operand 3']
    #allocation9 [shape = 'u8[8192]{0}', space=vmem, size = 0x2000, scoped, tag = 'input window, operand 4']
    #allocation10 [shape = 's32[2]{0}', space=sflag, size = 0x8, scoped, tag = 'scoped memory for tpu_custom_call.1']
    #allocation11 [shape = 'u8[1024]{0}', space=vmem, size = 0x400, scoped, tag = 'output window, operand 0']
    %11 = vsyncpa [#allocation4], 0
    %s12 = scalar_lea.sflag [#allocation4], 1
    %13 = vsyncpa %s12, 0
    %14 = vsyncpa [#allocation7], 0
    %s15 = scalar_lea.sflag [#allocation7], 1
    %16 = vsyncpa %s15, 0
    %17 = vsyncpa [#allocation10], 0
    %s18 = scalar_lea.sflag [#allocation10], 1
    %19 = vsyncpa %s18, 0
    %20 = vsyncpa [#allocation5], 0
    %s21 = scalar_lea.sflag [#allocation5], 1
    %22 = vsyncpa %s21, 0
    loop: start=0, step=1, limit=6
    $region2: #{tpu_custom_call.1} parent=1 // loop_pre_header
      _
    $region3: #{tpu_custom_call.1} parent=1 // loop_header
      %s24 = sphi 0, %s28
      %p25 = scmp.ge.s32.totalorder %s24, 6
      %s31 = sphi 0, %s50
      %s32 = sphi 0, %s46
      %s33 = sphi 0, %s42
      %s34 = sphi 0, %s31
      %s35 = sphi 0, %s32
      %s36 = sphi 0, %s33
      %s37 = sphi 0, %s34
      %s38 = sphi 0, %s35
      %s39 = sphi 0, %s36
      %s59 = sphi 0, %s61
      %s62 = sphi 0, %s59
      %s63 = sphi 0, %s62
      %s79 = sphi 0, %s63
      %s91 = sphi 0, %s93
      %s94 = sphi 0, %s91
      %s95 = sphi 0, %s94
      %s111 = sphi 0, %s95
      %s123 = sphi 0, %s125
      %s126 = sphi 0, %s123
      %s127 = sphi 0, %s126
      %s143 = sphi 0, %s127
      %s155 = sphi 0, %s157
      %s158 = sphi 0, %s155
      %s159 = sphi 0, %s158
      %s175 = sphi 0, %s159
      %s181 = sphi 0, %s183
      %s184 = sphi 0, %s181
      %s185 = sphi 0, %s184
      %s201 = sphi 0, %s185
      %s207 = sphi 0, %s209
      %s210 = sphi 0, %s207
      %s211 = sphi 0, %s210
      %s227 = sphi 0, %s211
      %s235 = sphi 0, %s237
      %s238 = sphi 0, %s235
      %s239 = sphi 0, %s238
      %s255 = sphi 0, %s239
    $region4: #{tpu_custom_call.1} parent=1 // loop_header_branch
      %27 = sbr.rel (%p25) target = $region8
    $region5: #{tpu_custom_call.1} parent=1 // loop_body
      %s29 = ssub.s32 %s24, 1
      %s30 = ssub.s32 %s24, 2
      %s40 = sadd.s32 1, %s33
      %p41 = scmp.ge.s32.totalorder %s40, 2
      %s42 = scalar_select %p41, 0, %s40
      %s43 = sadd.s32 1, %s32
      %s44 = scalar_select %p41, %s43, %s32
      %p45 = scmp.ge.s32.totalorder %s44, 1
      %s46 = scalar_select %p45, 0, %s44
      %s47 = sadd.s32 1, %s31
      %s48 = scalar_select %p45, %s47, %s31
      %p49 = scmp.ge.s32.totalorder %s48, 2
      %s50 = scalar_select %p49, 0, %s48
      %s51 = smul.u32 %s32, 2
      %s52 = sadd.s32 %s51, %s33
      %s53 = smul.u32 %s46, 2
      %s54 = sadd.s32 %s53, %s42
      %s55 = ssub.s32 %s31, %s50
      %s56 = ssub.s32 %s52, %s54
      %s57 = sor.u32 %s55, %s56
      %p58 = scmp.eq.s32.totalorder %s57, 0
      %s60 = sadd.s32 %s59, 1
      %s61 = scalar_select %p58, %s59, %s60
      %p64 = pneg %p58
      %p65 = scmp.eq.s32.totalorder %s24, 3
      %p66 = por %p64, %p65
      %p67 = scmp.ne.s32.totalorder %s59, %s62
      %p68 = scmp.eq.s32.totalorder %s24, 0
      %p69 = por %p67, %p68
      %p70 = scmp.ne.s32.totalorder %s59, %s62
      %p71 = scmp.eq.s32.totalorder %s29, 3
      %p72 = por %p70, %p71
      %p73 = scmp.ne.s32.totalorder %s62, %s63
      %p74 = scmp.eq.s32.totalorder %s29, 0
      %p75 = por %p73, %p74
      %p76 = scmp.ne.s32.totalorder %s62, %s63
      %p77 = scmp.eq.s32.totalorder %s30, 3
      %p78 = por %p76, %p77
      %p80 = scmp.ne.s32.totalorder %s63, %s79
      %p81 = scmp.eq.s32.totalorder %s30, 0
      %p82 = por %p80, %p81
      %s83 = smul.u32 %s32, 2
      %s84 = sadd.s32 %s83, %s33
      %s85 = smul.u32 %s46, 2
      %s86 = sadd.s32 %s85, %s42
      %s87 = ssub.s32 %s31, %s50
      %s88 = ssub.s32 %s84, %s86
      %s89 = sor.u32 %s87, %s88
      %p90 = scmp.eq.s32.totalorder %s89, 0
      %s92 = sadd.s32 %s91, 1
      %s93 = scalar_select %p90, %s91, %s92
      %p96 = pneg %p90
      %p97 = scmp.eq.s32.totalorder %s24, 3
      %p98 = por %p96, %p97
      %p99 = scmp.ne.s32.totalorder %s91, %s94
      %p100 = scmp.eq.s32.totalorder %s24, 0
      %p101 = por %p99, %p100
      %p102 = scmp.ne.s32.totalorder %s91, %s94
      %p103 = scmp.eq.s32.totalorder %s29, 3
      %p104 = por %p102, %p103
      %p105 = scmp.ne.s32.totalorder %s94, %s95
      %p106 = scmp.eq.s32.totalorder %s29, 0
      %p107 = por %p105, %p106
      %p108 = scmp.ne.s32.totalorder %s94, %s95
      %p109 = scmp.eq.s32.totalorder %s30, 3
      %p110 = por %p108, %p109
      %p112 = scmp.ne.s32.totalorder %s95, %s111
      %p113 = scmp.eq.s32.totalorder %s30, 0
      %p114 = por %p112, %p113
      %s115 = smul.u32 %s32, 2
      %s116 = sadd.s32 %s115, %s33
      %s117 = smul.u32 %s46, 2
      %s118 = sadd.s32 %s117, %s42
      %s119 = ssub.s32 %s31, %s50
      %s120 = ssub.s32 %s116, %s118
      %s121 = sor.u32 %s119, %s120
      %p122 = scmp.eq.s32.totalorder %s121, 0
      %s124 = sadd.s32 %s123, 1
      %s125 = scalar_select %p122, %s123, %s124
      %p128 = pneg %p122
      %p129 = scmp.eq.s32.totalorder %s24, 3
      %p130 = por %p128, %p129
      %p131 = scmp.ne.s32.totalorder %s123, %s126
      %p132 = scmp.eq.s32.totalorder %s24, 0
      %p133 = por %p131, %p132
      %p134 = scmp.ne.s32.totalorder %s123, %s126
      %p135 = scmp.eq.s32.totalorder %s29, 3
      %p136 = por %p134, %p135
      %p137 = scmp.ne.s32.totalorder %s126, %s127
      %p138 = scmp.eq.s32.totalorder %s29, 0
      %p139 = por %p137, %p138
      %p140 = scmp.ne.s32.totalorder %s126, %s127
      %p141 = scmp.eq.s32.totalorder %s30, 3
      %p142 = por %p140, %p141
      %p144 = scmp.ne.s32.totalorder %s127, %s143
      %p145 = scmp.eq.s32.totalorder %s30, 0
      %p146 = por %p144, %p145
      %s147 = smul.u32 %s32, 2
      %s148 = sadd.s32 %s147, %s33
      %s149 = smul.u32 %s46, 2
      %s150 = sadd.s32 %s149, %s42
      %s151 = ssub.s32 %s31, %s50
      %s152 = ssub.s32 %s148, %s150
      %s153 = sor.u32 %s151, %s152
      %p154 = scmp.eq.s32.totalorder %s153, 0
      %s156 = sadd.s32 %s155, 1
      %s157 = scalar_select %p154, %s155, %s156
      %p160 = pneg %p154
      %p161 = scmp.eq.s32.totalorder %s24, 3
      %p162 = por %p160, %p161
      %p163 = scmp.ne.s32.totalorder %s155, %s158
      %p164 = scmp.eq.s32.totalorder %s24, 0
      %p165 = por %p163, %p164
      %p166 = scmp.ne.s32.totalorder %s155, %s158
      %p167 = scmp.eq.s32.totalorder %s29, 3
      %p168 = por %p166, %p167
      %p169 = scmp.ne.s32.totalorder %s158, %s159
      %p170 = scmp.eq.s32.totalorder %s29, 0
      %p171 = por %p169, %p170
      %p172 = scmp.ne.s32.totalorder %s158, %s159
      %p173 = scmp.eq.s32.totalorder %s30, 3
      %p174 = por %p172, %p173
      %p176 = scmp.ne.s32.totalorder %s159, %s175
      %p177 = scmp.eq.s32.totalorder %s30, 0
      %p178 = por %p176, %p177
      %s179 = ssub.s32 %s31, %s50
      %p180 = scmp.eq.s32.totalorder %s179, 0
      %s182 = sadd.s32 %s181, 1
      %s183 = scalar_select %p180, %s181, %s182
      %p186 = pneg %p180
      %p187 = scmp.eq.s32.totalorder %s24, 3
      %p188 = por %p186, %p187
      %p189 = scmp.ne.s32.totalorder %s181, %s184
      %p190 = scmp.eq.s32.totalorder %s24, 0
      %p191 = por %p189, %p190
      %p192 = scmp.ne.s32.totalorder %s181, %s184
      %p193 = scmp.eq.s32.totalorder %s29, 3
      %p194 = por %p192, %p193
      %p195 = scmp.ne.s32.totalorder %s184, %s185
      %p196 = scmp.eq.s32.totalorder %s29, 0
      %p197 = por %p195, %p196
      %p198 = scmp.ne.s32.totalorder %s184, %s185
      %p199 = scmp.eq.s32.totalorder %s30, 3
      %p200 = por %p198, %p199
      %p202 = scmp.ne.s32.totalorder %s185, %s201
      %p203 = scmp.eq.s32.totalorder %s30, 0
      %p204 = por %p202, %p203
      %s205 = ssub.s32 %s31, %s50
      %p206 = scmp.eq.s32.totalorder %s205, 0
      %s208 = sadd.s32 %s207, 1
      %s209 = scalar_select %p206, %s207, %s208
      %p212 = pneg %p206
      %p213 = scmp.eq.s32.totalorder %s24, 3
      %p214 = por %p212, %p213
      %p215 = scmp.ne.s32.totalorder %s207, %s210
      %p216 = scmp.eq.s32.totalorder %s24, 0
      %p217 = por %p215, %p216
      %p218 = scmp.ne.s32.totalorder %s207, %s210
      %p219 = scmp.eq.s32.totalorder %s29, 3
      %p220 = por %p218, %p219
      %p221 = scmp.ne.s32.totalorder %s210, %s211
      %p222 = scmp.eq.s32.totalorder %s29, 0
      %p223 = por %p221, %p222
      %p224 = scmp.ne.s32.totalorder %s210, %s211
      %p225 = scmp.eq.s32.totalorder %s30, 3
      %p226 = por %p224, %p225
      %p228 = scmp.ne.s32.totalorder %s211, %s227
      %p229 = scmp.eq.s32.totalorder %s30, 0
      %p230 = por %p228, %p229
      %s231 = ssub.s32 %s31, %s50
      %s232 = ssub.s32 %s32, %s46
      %s233 = sor.u32 %s231, %s232
      %p234 = scmp.eq.s32.totalorder %s233, 0
      %s236 = sadd.s32 %s235, 1
      %s237 = scalar_select %p234, %s235, %s236
      %p240 = pneg %p234
      %p241 = scmp.eq.s32.totalorder %s24, 3
      %p242 = por %p240, %p241
      %p243 = scmp.ne.s32.totalorder %s235, %s238
      %p244 = scmp.eq.s32.totalorder %s24, 0
      %p245 = por %p243, %p244
      %p246 = scmp.ne.s32.totalorder %s235, %s238
      %p247 = scmp.eq.s32.totalorder %s29, 3
      %p248 = por %p246, %p247
      %p249 = scmp.ne.s32.totalorder %s238, %s239
      %p250 = scmp.eq.s32.totalorder %s29, 0
      %p251 = por %p249, %p250
      %p252 = scmp.ne.s32.totalorder %s238, %s239
      %p253 = scmp.eq.s32.totalorder %s30, 3
      %p254 = por %p252, %p253
      %p256 = scmp.ne.s32.totalorder %s239, %s255
      %p257 = scmp.eq.s32.totalorder %s30, 0
      %p258 = por %p256, %p257
      %p259 = scmp.le.s32.totalorder 1, %s24
      %p260 = scmp.lt.s32.totalorder %s24, 5
      %p261 = pnand %p259, %p260
      %p262 = pneg %p261
      // Predicated region
      $region9: #{tpu_custom_call.1} parent=5 // pred_check
        _
      $region10: #{tpu_custom_call.1} parent=5 // pred_check_branch
        %264 = sbr.rel (%p261) target = $region12
      $region11: #{tpu_custom_call.1} parent=5 // pred_region
        %s265 = ssub.s32 %s24, 1
      $region12: #{tpu_custom_call.1} parent=5 // pred_fallthru
        _
      %p266 = scmp.lt.s32.totalorder %s24, 4
      // Predicated region
      $region13: #{tpu_custom_call.1} parent=5 // pred_check
        %p267 = pneg %p266
      $region14: #{tpu_custom_call.1} parent=5 // pred_check_branch
        %269 = sbr.rel (%p267) target = $region16
      $region15: #{tpu_custom_call.1} parent=5 // pred_region
        // Predicated region
        $region17: #{tpu_custom_call.1} parent=15 // pred_check
          %p270 = pneg %p69
        $region18: #{tpu_custom_call.1} parent=15 // pred_check_branch
          %272 = sbr.rel (%p270) target = $region20
        $region19: #{tpu_custom_call.1} parent=15 // pred_region
          %s273 = sand.u32 %s59, 1
          %s274 = scalar_lea.sflag [#allocation4], %s273
          %s275 = sand.u32 %s59, 1
          %s276 = smul.addr %s275, 4
          %s277 = scalar_lea.vmem [#allocation3], %s276
          %s278 = smul.u32 %s32, 2
          %s279 = sadd.s32 %s278, %s33
          %s281 = ssub.s32 64, 64
          %282 = vsyncadd %s274, %s281
          %s283 = smul.addr %s31, 2
          %s284 = sadd.s32 %s279, %s283
          %s285 = smul.addr %s284, 64
          %s286 = scalar_lea.hbm %s0, %s285
          %s288 = sshll.u32 %s277, 4
          %s289 = int_to_ptr.vmem [resolvable:$true] %s288
          %291 = dma.hbm_to_vmem [thread:$0]  %s286, 64, %s289, %s274
        $region20: #{tpu_custom_call.1} parent=15 // pred_fallthru
          _
        // Predicated region
        $region21: #{tpu_custom_call.1} parent=15 // pred_check
          %p292 = pneg %p101
        $region22: #{tpu_custom_call.1} parent=15 // pred_check_branch
          %294 = sbr.rel (%p292) target = $region24
        $region23: #{tpu_custom_call.1} parent=15 // pred_region
          %s295 = smul.u32 %s32, 2
          %s296 = sadd.s32 %s295, %s33
          %p297 = scmp.lt.s32.totalorder %s31, 1
          %s298 = scalar_select %p297, %s31, 1
          %p299 = scmp.lt.s32.totalorder %s296, 1
          %s300 = scalar_select %p299, %s296, 1
          %s301 = smul.addr %s298, 2
          %s302 = sadd.s32 %s300, %s301
          %s303 = smul.addr %s302, 4
          %s304 = scalar_lea.vmem %s1, %s303
          %s305 = smul.u32 %s32, 2
          %s306 = sadd.s32 %s305, %s33
        $region24: #{tpu_custom_call.1} parent=15 // pred_fallthru
          _
        // Predicated region
        $region25: #{tpu_custom_call.1} parent=15 // pred_check
          %p307 = pneg %p133
        $region26: #{tpu_custom_call.1} parent=15 // pred_check_branch
          %309 = sbr.rel (%p307) target = $region28
        $region27: #{tpu_custom_call.1} parent=15 // pred_region
          %s310 = sand.u32 %s24, 1
          %s311 = scalar_lea.sflag [#allocation7], %s310
          %s312 = sand.u32 %s123, 1
          %s313 = smul.addr %s312, 4
          %s314 = scalar_lea.vmem [#allocation6], %s313
          %s315 = smul.u32 %s32, 2
          %s316 = sadd.s32 %s315, %s33
          %s318 = ssub.s32 64, 64
          %319 = vsyncadd %s311, %s318
          %s320 = smul.addr %s31, 2
          %s321 = sadd.s32 %s316, %s320
          %s322 = smul.addr %s321, 64
          %s323 = scalar_lea.hbm %s2, %s322
          %s325 = sshll.u32 %s314, 4
          %s326 = int_to_ptr.vmem [resolvable:$true] %s325
          %328 = dma.hbm_to_vmem [thread:$0]  %s323, 64, %s326, %s311
        $region28: #{tpu_custom_call.1} parent=15 // pred_fallthru
          _
        // Predicated region
        $region29: #{tpu_custom_call.1} parent=15 // pred_check
          %p329 = pneg %p165
        $region30: #{tpu_custom_call.1} parent=15 // pred_check_branch
          %331 = sbr.rel (%p329) target = $region32
        $region31: #{tpu_custom_call.1} parent=15 // pred_region
          %s332 = sand.u32 %s24, 1
          %s333 = scalar_lea.sflag [#allocation7], %s332
          %s334 = sand.u32 %s155, 1
          %s335 = smul.addr %s334, 4
          %s336 = scalar_lea.vmem [#allocation8], %s335
          %s337 = smul.u32 %s32, 2
          %s338 = sadd.s32 %s337, %s33
          %s340 = ssub.s32 64, 64
          %341 = vsyncadd %s333, %s340
          %s342 = smul.addr %s31, 2
          %s343 = sadd.s32 %s338, %s342
          %s344 = smul.addr %s343, 64
          %s345 = scalar_lea.hbm %s3, %s344
          %s347 = sshll.u32 %s336, 4
          %s348 = int_to_ptr.vmem [resolvable:$true] %s347
          %350 = dma.hbm_to_vmem [thread:$0]  %s345, 64, %s348, %s333
        $region32: #{tpu_custom_call.1} parent=15 // pred_fallthru
          _
        // Predicated region
        $region33: #{tpu_custom_call.1} parent=15 // pred_check
          %p351 = pneg %p191
        $region34: #{tpu_custom_call.1} parent=15 // pred_check_branch
          %353 = sbr.rel (%p351) target = $region36
        $region35: #{tpu_custom_call.1} parent=15 // pred_region
          %s354 = sand.u32 %s181, 1
          %s355 = scalar_lea.sflag [#allocation10], %s354
          %s356 = sand.u32 %s181, 1
          %s357 = smul.addr %s356, 8
          %s358 = scalar_lea.vmem [#allocation9], %s357
          %s360 = ssub.s32 128, 128
          %361 = vsyncadd %s355, %s360
          %s362 = smul.addr %s31, 128
          %s363 = scalar_lea.hbm %s4, %s362
          %s365 = sshll.u32 %s358, 4
          %s366 = int_to_ptr.vmem [resolvable:$true] %s365
          %368 = dma.hbm_to_vmem [thread:$0]  %s363, 128, %s366, %s355
        $region36: #{tpu_custom_call.1} parent=15 // pred_fallthru
          _
        // Predicated region
        $region37: #{tpu_custom_call.1} parent=15 // pred_check
          %p369 = pneg %p217
        $region38: #{tpu_custom_call.1} parent=15 // pred_check_branch
          %371 = sbr.rel (%p369) target = $region40
        $region39: #{tpu_custom_call.1} parent=15 // pred_region
          %p372 = scmp.lt.s32.totalorder %s31, 1
          %s373 = scalar_select %p372, %s31, 1
          %s374 = smul.addr %s373, 4
          %s375 = scalar_lea.vmem %s5, %s374
        $region40: #{tpu_custom_call.1} parent=15 // pred_fallthru
          _
      $region16: #{tpu_custom_call.1} parent=5 // pred_fallthru
        _
      %p376 = scmp.le.s32.totalorder 1, %s24
      %p377 = scmp.lt.s32.totalorder %s24, 5
      %p378 = pnand %p376, %p377
      %p379 = pneg %p378
      // Predicated region
      $region41: #{tpu_custom_call.1} parent=5 // pred_check
        _
      $region42: #{tpu_custom_call.1} parent=5 // pred_check_branch
        %381 = sbr.rel (%p378) target = $region44
      $region43: #{tpu_custom_call.1} parent=5 // pred_region
        %s382 = ssub.s32 %s24, 1
        %s383 = sand.u32 %s62, 1
        %s384 = scalar_lea.sflag [#allocation4], %s383
        %s385 = sand.u32 %s62, 1
        %s386 = smul.addr %s385, 4
        %s387 = scalar_lea.vmem [#allocation3], %s386
        // Predicated region
        $region45: #{tpu_custom_call.1} parent=43 // pred_check
          %p388 = pneg %p75
        $region46: #{tpu_custom_call.1} parent=43 // pred_check_branch
          %390 = sbr.rel (%p388) target = $region48
        $region47: #{tpu_custom_call.1} parent=43 // pred_region
          %391 = dma.done %s384, 64
        $region48: #{tpu_custom_call.1} parent=43 // pred_fallthru
          _
        %s392 = sand.u32 %s29, 1
        %s393 = scalar_lea.sflag [#allocation7], %s392
        %s394 = sand.u32 %s126, 1
        %s395 = smul.addr %s394, 4
        %s396 = scalar_lea.vmem [#allocation6], %s395
        // Predicated region
        $region49: #{tpu_custom_call.1} parent=43 // pred_check
          %p397 = pneg %p139
        $region50: #{tpu_custom_call.1} parent=43 // pred_check_branch
          %399 = sbr.rel (%p397) target = $region52
        $region51: #{tpu_custom_call.1} parent=43 // pred_region
          %400 = dma.done %s393, 64
        $region52: #{tpu_custom_call.1} parent=43 // pred_fallthru
          _
        %s401 = sand.u32 %s29, 1
        %s402 = scalar_lea.sflag [#allocation7], %s401
        %s403 = sand.u32 %s158, 1
        %s404 = smul.addr %s403, 4
        %s405 = scalar_lea.vmem [#allocation8], %s404
        // Predicated region
        $region53: #{tpu_custom_call.1} parent=43 // pred_check
          %p406 = pneg %p171
        $region54: #{tpu_custom_call.1} parent=43 // pred_check_branch
          %408 = sbr.rel (%p406) target = $region56
        $region55: #{tpu_custom_call.1} parent=43 // pred_region
          %409 = dma.done %s402, 64
        $region56: #{tpu_custom_call.1} parent=43 // pred_fallthru
          _
        %s410 = sand.u32 %s184, 1
        %s411 = scalar_lea.sflag [#allocation10], %s410
        %s412 = sand.u32 %s184, 1
        %s413 = smul.addr %s412, 8
        %s414 = scalar_lea.vmem [#allocation9], %s413
        // Predicated region
        $region57: #{tpu_custom_call.1} parent=43 // pred_check
          %p415 = pneg %p197
        $region58: #{tpu_custom_call.1} parent=43 // pred_check_branch
          %417 = sbr.rel (%p415) target = $region60
        $region59: #{tpu_custom_call.1} parent=43 // pred_region
          %418 = dma.done %s411, 128
        $region60: #{tpu_custom_call.1} parent=43 // pred_fallthru
          _
        %s419 = sand.u32 %s62, 1
        %s420 = scalar_lea.sflag [#allocation4], %s419
        %s421 = sand.u32 %s62, 1
        %s422 = smul.addr %s421, 4
        %s423 = scalar_lea.vmem [#allocation3], %s422
        %p424 = pneg %p75
        %p425 = pneg %p72
        %s426 = smul.u32 %s35, 2
        %s427 = sadd.s32 %s426, %s36
        %p428 = scmp.lt.s32.totalorder %s34, 1
        %s429 = scalar_select %p428, %s34, 1
        %p430 = scmp.lt.s32.totalorder %s427, 1
        %s431 = scalar_select %p430, %s427, 1
        %s432 = smul.addr %s429, 2
        %s433 = sadd.s32 %s431, %s432
        %s434 = smul.addr %s433, 4
        %s435 = scalar_lea.vmem %s1, %s434
        %p436 = pneg %p107
        %p437 = pneg %p104
        %s438 = sand.u32 %s29, 1
        %s439 = scalar_lea.sflag [#allocation7], %s438
        %s440 = sand.u32 %s126, 1
        %s441 = smul.addr %s440, 4
        %s442 = scalar_lea.vmem [#allocation6], %s441
        %p443 = pneg %p139
        %p444 = pneg %p136
        %s445 = sand.u32 %s29, 1
        %s446 = scalar_lea.sflag [#allocation7], %s445
        %s447 = sand.u32 %s158, 1
        %s448 = smul.addr %s447, 4
        %s449 = scalar_lea.vmem [#allocation8], %s448
        %p450 = pneg %p171
        %p451 = pneg %p168
        %s452 = sand.u32 %s184, 1
        %s453 = scalar_lea.sflag [#allocation10], %s452
        %s454 = sand.u32 %s184, 1
        %s455 = smul.addr %s454, 8
        %s456 = scalar_lea.vmem [#allocation9], %s455
        %p457 = pneg %p197
        %p458 = pneg %p194
        %p459 = scmp.lt.s32.totalorder %s34, 1
        %s460 = scalar_select %p459, %s34, 1
        %s461 = smul.addr %s460, 4
        %s462 = scalar_lea.vmem %s5, %s461
        %p463 = pneg %p223
        %p464 = pneg %p220
        %p465 = pneg %p251
        %p466 = pneg %p248
        %s467 = sand.u32 %s238, 1
        %s468 = scalar_lea.sflag [#allocation5], %s467
        %s469 = sand.u32 %s238, 1
        %s470 = scalar_lea.vmem [#allocation11], %s469
        %s471 = smul.u32 %s35, 2
        %s472 = sadd.s32 %s471, %s36
        %s473 = smul.u32 %s35, 2
        %s474 = sadd.s32 %s473, %s36
        %p475 = scmp.lt.s32.totalorder %s34, 1
        %s476 = scalar_select %p475, %s34, 1
        %p477 = scmp.lt.s32.totalorder %s474, 1
        %s478 = scalar_select %p477, %s474, 1
        %s479 = smul.addr %s476, 2
        %s480 = sadd.s32 %s478, %s479
        %s481 = smul.addr %s480, 4
        %s482 = scalar_lea.vmem %s1, %s481
        %s483 = smul.u32 %s35, 2
        %s484 = sadd.s32 %s483, %s36
        %s485 = smul.u32 %s35, 2
        %s486 = sadd.s32 %s485, %s36
        %s487 = smul.u32 %s35, 2
        %s488 = sadd.s32 %s487, %s36
        %p489 = scmp.lt.s32.totalorder %s34, 1
        %s490 = scalar_select %p489, %s34, 1
        %s491 = smul.addr %s490, 4
        %s492 = scalar_lea.vmem %s5, %s491
        %p493 = scmp.eq.s32.totalorder %s36, 0
        // Predicated region
        $region61: #{tpu_custom_call.1} parent=43 // pred_check
          %p494 = pneg %p493
        $region62: #{tpu_custom_call.1} parent=43 // pred_check_branch
          %496 = sbr.rel (%p494) target = $region64
        $region63: #{tpu_custom_call.1} parent=43 // pred_region
          %497 = vst [vmem:[#allocation2] sm:$0xf] 0.0
          %498 = vst [vmem:[#allocation2 + $0x4] sm:$0xf] 0.0
          %499 = vst [vmem:[#allocation2 + $0x8] sm:$0xf] 0.0
          %500 = vst [vmem:[#allocation2 + $0xc] sm:$0xf] 0.0
        $region64: #{tpu_custom_call.1} parent=43 // pred_fallthru
          _
        %v501 = vld [vmem:[%s387] sm:$0xf]
        %v502 = vld [vmem:[%s396] sm:$0xf]
        %v503 = vand.u32 2147483647, %v501
        %v504 = vsub.f32 0.0, %v503
        %v505 = vmul.f32 %v504, 1.442695
        %v506 = vpow.pop %v505
        %v507 = vadd.f32 %v506, 1.0
        %v508 = vlog2.pop %v507
        %v509 = vmul.f32 %v508, 0.6931472
        %v510 = vmin.f32 %v501, 0.0
        %v511 = vsub.f32 %v510, %v509
        %v512 = vmax.f32 %v501, 0.0
        %v513 = vsub.f32 0.0, %v512
        %v514 = vsub.f32 %v513, %v509
        %v515 = vmul.f32 %v511, 1.442695
        %v516 = vpow.pop %v515
        %v517 = vmul.f32 %v514, 1.442695
        %v518 = vpow.pop %v517
        %vm519 = vcmp.eq.f32.partialorder %v502, 1.0
        %v520 = vsub.f32 1.0, %v502
        %v521 = vmul.f32 %v520, %v520
        %v522 = vmul.f32 %v521, %v521
        %v523 = vmul.f32 %v511, %v518
        %v524 = vmul.f32 %v523, %v518
        %v525 = vmul.f32 %v514, %v516
        %v526 = vmul.f32 %v525, %v516
        %v527 = vmul.f32 %v526, %v522
        %v528 = vsel %vm519, %v524, %v527
        %v529 = vsel %vm519, 1.0, 0.0
        %v530 = vld [vmem:[%s482] sm:$0xf]
        %v531 = vld [vmem:[%s405] sm:$0xf]
        %v532 = vand.u32 2147483647, %v530
        %v533 = vsub.f32 0.0, %v532
        %v534 = vmul.f32 %v533, 1.442695
        %v535 = vpow.pop %v534
        %v536 = vadd.f32 %v535, 1.0
        %v537 = vlog2.pop %v536
        %v538 = vmul.f32 %v537, 0.6931472
        %v539 = vmin.f32 %v530, 0.0
        %v540 = vsub.f32 %v539, %v538
        %v541 = vmax.f32 %v530, 0.0
        %v542 = vsub.f32 0.0, %v541
        %v543 = vsub.f32 %v542, %v538
        %v544 = vmul.f32 %v540, 1.442695
        %v545 = vpow.pop %v544
        %v546 = vmul.f32 %v543, 1.442695
        %v547 = vpow.pop %v546
        %vm548 = vcmp.eq.f32.partialorder %v531, 1.0
        %v549 = vsub.f32 1.0, %v531
        %v550 = vmul.f32 %v549, %v549
        %v551 = vmul.f32 %v550, %v550
        %v552 = vmul.f32 %v540, %v547
        %v553 = vmul.f32 %v552, %v547
        %v554 = vmul.f32 %v543, %v545
        %v555 = vmul.f32 %v554, %v545
        %v556 = vmul.f32 %v555, %v551
        %v557 = vsel %vm548, %v553, %v556
        %v558 = vsel %vm548, 1.0, 0.0
        %v559 = vld [vmem:[#allocation2] sm:$0xf]
        %v560 = vadd.f32 %v559, %v528
        %561 = vst [vmem:[#allocation2] sm:$0xf] %v560
        %s562 = scalar_lea.vmem [#allocation2], 4
        %v563 = vld [vmem:[%s562] sm:$0xf]
        %v564 = vadd.f32 %v563, %v529
        %565 = vst [vmem:[%s562] sm:$0xf] %v564
        %s566 = scalar_lea.vmem [#allocation2], 8
        %v567 = vld [vmem:[%s566] sm:$0xf]
        %v568 = vadd.f32 %v567, %v557
        %569 = vst [vmem:[%s566] sm:$0xf] %v568
        %s570 = scalar_lea.vmem [#allocation2], 12
        %v571 = vld [vmem:[%s570] sm:$0xf]
        %v572 = vadd.f32 %v571, %v558
        %573 = vst [vmem:[%s570] sm:$0xf] %v572
        %p574 = scmp.eq.s32.totalorder %s36, 1
        // Predicated region
        $region65: #{tpu_custom_call.1} parent=43 // pred_check
          %p575 = pneg %p574
        $region66: #{tpu_custom_call.1} parent=43 // pred_check_branch
          %577 = sbr.rel (%p575) target = $region68
        $region67: #{tpu_custom_call.1} parent=43 // pred_region
          %v578 = vlaneseq
          %v579 = vand.u32 %v578, 127
          %v580 = vld [vmem:[#allocation2] sm:$0xf]
          %vm581 = vcmask 1043456
          %v582 = vsel %vm581, %v580, 0.0
          %583 = vadd.xlane.f32.xlu0 %v582
          %v584 = vpop.xlane.xlu0 %583
          %v585 = vrot.slane %v584, 4
          %v586 = vadd.f32 %v584, %v585
          %v587 = vrot.slane %v586, 2
          %v588 = vadd.f32 %v586, %v587
          %v589 = vrot.slane %v588, 1
          %v590 = vadd.f32 %v588, %v589
          %s591 = vtos %v590
          %v592 = vld [vmem:[%s562] sm:$0xf]
          %v593 = vsel %vm581, %v592, 0.0
          %594 = vadd.xlane.f32.xlu0 %v593
          %v595 = vpop.xlane.xlu0 %594
          %v596 = vrot.slane %v595, 4
          %v597 = vadd.f32 %v595, %v596
          %v598 = vrot.slane %v597, 2
          %v599 = vadd.f32 %v597, %v598
          %v600 = vrot.slane %v599, 1
          %v601 = vadd.f32 %v599, %v600
          %s602 = vtos %v601
          %v603 = vld [vmem:[%s566] sm:$0xf]
          %v604 = vsel %vm581, %v603, 0.0
          %605 = vadd.xlane.f32.xlu0 %v604
          %v606 = vpop.xlane.xlu0 %605
          %v607 = vrot.slane %v606, 4
          %v608 = vadd.f32 %v606, %v607
          %v609 = vrot.slane %v608, 2
          %v610 = vadd.f32 %v608, %v609
          %v611 = vrot.slane %v610, 1
          %v612 = vadd.f32 %v610, %v611
          %s613 = vtos %v612
          %v614 = vld [vmem:[%s570] sm:$0xf]
          %v615 = vsel %vm581, %v614, 0.0
          %616 = vadd.xlane.f32.xlu0 %v615
          %v617 = vpop.xlane.xlu0 %616
          %v618 = vrot.slane %v617, 4
          %v619 = vadd.f32 %v617, %v618
          %v620 = vrot.slane %v619, 2
          %v621 = vadd.f32 %v619, %v620
          %v622 = vrot.slane %v621, 1
          %v623 = vadd.f32 %v621, %v622
          %s624 = vtos %v623
          %v625 = vld [vmem:[%s414] sm:$0xff]
          %v626 = vld [vmem:[%s492] sm:$0x7]
          %v628 = vrot.slane %v625, 2
          %v630 = vsub.f32 %v625, %v628
          %v631 = vand.u32 2147483647, %v630
          %vm632 = vcmp.lt.f32.partialorder %v631, 1.0
          %v633 = vmul.f32 %v630, 0.5
          %v634 = vmul.f32 %v633, %v630
          %v635 = vsub.f32 %v631, 0.5
          %v636 = vsel %vm632, %v634, %v635
          %v637 = vlaneseq
          %v638 = vshrl.u32 %v637, 7
          %v639 = vsub.s32 2, %v638
          %v640 = vrot.slane %v626, %v639
          %v641 = vmul.f32 %v636, %v640
          %vm642 = vcmask 58368
          %v643 = vsel %vm642, %v641, 0.0
          %644 = vadd.xlane.f32.xlu0 %v643
          %v645 = vpop.xlane.xlu0 %644
          %v646 = vrot.slane %v645, 4
          %v647 = vadd.f32 %v645, %v646
          %v648 = vrot.slane %v647, 2
          %v649 = vadd.f32 %v647, %v648
          %v650 = vrot.slane %v649, 1
          %v651 = vadd.f32 %v649, %v650
          %s652 = vtos %v651
          %v654 = vrot.slane %v641, 4
          %v656 = vsel %vm642, %v654, 0.0
          %657 = vadd.xlane.f32.xlu0 %v656
          %v658 = vpop.xlane.xlu0 %657
          %v659 = vrot.slane %v658, 4
          %v660 = vadd.f32 %v658, %v659
          %v661 = vrot.slane %v660, 2
          %v662 = vadd.f32 %v660, %v661
          %v663 = vrot.slane %v662, 1
          %v664 = vadd.f32 %v662, %v663
          %s665 = vtos %v664
          %v667 = vrot.slane %v626, 2
          %vm669 = vcmask 57344
          %v670 = vsel %vm669, %v667, 0.0
          %671 = vadd.xlane.f32.xlu0 %v670
          %v672 = vpop.xlane.xlu0 %671
          %v673 = vrot.slane %v672, 4
          %v674 = vadd.f32 %v672, %v673
          %v675 = vrot.slane %v674, 2
          %v676 = vadd.f32 %v674, %v675
          %v677 = vrot.slane %v676, 1
          %v678 = vadd.f32 %v676, %v677
          %s679 = vtos %v678
          %v680 = vrot.slane %v626, 1
          %v682 = vadd.f32 %v626, %v680
          %v683 = vmul.f32 %v682, 0.5
          %s684 = sadd.f32 %s679, 0.0001
          %v685 = vstv %s684
          %v686 = vrcp.pop %v685
          %s687 = vtos %v686
          %v688 = vsub.f32 %v626, %v683
          %v689 = vmul.f32 %v688, %v688
          %v691 = vrot.slane %v683, 7
          %v693 = vsub.f32 %v626, %v691
          %v694 = vmul.f32 %v693, %v693
          %v696 = vrot.slane %v694, 1
          %v698 = vadd.f32 %v689, %v696
          %v699 = vstv %s687
          %v700 = vmul.f32 %v698, %v699
          %v701 = vmul.f32 %v700, %v667
          %v702 = vsel %vm669, %v701, 0.0
          %703 = vadd.xlane.f32.xlu0 %v702
          %v704 = vpop.xlane.xlu0 %703
          %v705 = vrot.slane %v704, 4
          %v706 = vadd.f32 %v704, %v705
          %v707 = vrot.slane %v706, 2
          %v708 = vadd.f32 %v706, %v707
          %v709 = vrot.slane %v708, 1
          %v710 = vadd.f32 %v708, %v709
          %s711 = vtos %v710
          %712 = vxpose.xlu0.b32.start [1/16] %v626, 128
          %713 = vxpose.xlu0.b32.cont [2/16] 0.0, 128
          %714 = vxpose.xlu0.b32.cont [3/16] 0.0, 128
          %715 = vxpose.xlu0.b32.cont [4/16] 0.0, 128
          %716 = vxpose.xlu0.b32.cont [5/16] 0.0, 128
          %717 = vxpose.xlu0.b32.cont [6/16] 0.0, 128
          %718 = vxpose.xlu0.b32.cont [7/16] 0.0, 128
          %719 = vxpose.xlu0.b32.cont [8/16] 0.0, 128
          %720 = vxpose.xlu0.b32.cont [9/16] 0.0, 128
          %721 = vxpose.xlu0.b32.cont [10/16] 0.0, 128
          %722 = vxpose.xlu0.b32.cont [11/16] 0.0, 128
          %723 = vxpose.xlu0.b32.cont [12/16] 0.0, 128
          %724 = vxpose.xlu0.b32.cont [13/16] 0.0, 128
          %725 = vxpose.xlu0.b32.cont [14/16] 0.0, 128
          %726 = vxpose.xlu0.b32.cont [15/16] 0.0, 128
          %727 = vxpose.xlu0.b32.end [16/16] 0.0, 128
          %v728 = vpop.trf.xlu0
          %v729 = vpop.trf.xlu0
          %v730 = vpop.trf.xlu0
          %v731 = vpop.trf.xlu0
          %v732 = vpop.trf.xlu0
          %v733 = vpop.trf.xlu0
          %v734 = vpop.trf.xlu0
          %v735 = vpop.trf.xlu0
          %v736 = vpop.trf.xlu0
          %v737 = vpop.trf.xlu0
          %v738 = vpop.trf.xlu0
          %v739 = vpop.trf.xlu0
          %v740 = vpop.trf.xlu0
          %v741 = vpop.trf.xlu0
          %v742 = vpop.trf.xlu0
          %v743 = vpop.trf.xlu0
          %745 = vrot.lane.b32.xlu0 %v728, 127
          %v746 = vpop.permute.xlu0 %745
          %v748 = vadd.f32 %v728, %v746
          %v749 = vmul.f32 %v748, 0.5
          %750 = vset.pattern.permute.xlu0 2
          %751 = vperm.xlu0 %750, %v728
          %v752 = vpop.permute.xlu0 %751
          %v754 = vadd.f32 %v752, %v640
          %vm755 = vcmp.eq.f32.partialorder %v754, 2.0
          %757 = vset.pattern.permute.xlu0 0
          %758 = vperm.xlu0 %757, %v749
          %v759 = vpop.permute.xlu0 %758
          %v761 = vlaneseq
          %v762 = vshrl.u32 %v761, 7
          %v763 = vsub.s32 0, %v762
          %v764 = vrot.slane %v683, %v763
          %v765 = vsub.f32 %v759, %v764
          %v766 = vand.u32 2147483647, %v765
          %v767 = vsub.f32 2.0, %v766
          %v768 = vmax.f32 %v767, 0.0
          %s769 = smul.f32 %s687, 2.0
          %v770 = vstv %s769
          %v771 = vsub.f32 %v768, %v770
          %s772 = ssub.f32 %s679, 1.0
          %s773 = smul.f32 %s772, %s679
          %s774 = sadd.f32 %s773, 0.0001
          %v775 = vstv %s774
          %v776 = vrcp.pop %v775
          %v777 = vmul.f32 %v771, %v776
          %v778 = vsel %vm755, %v777, 0.0
          %vm779 = vcmask 64512
          %v780 = vsel %vm779, %v778, 0.0
          %781 = vadd.xlane.f32.xlu0 %v780
          %v782 = vpop.xlane.xlu0 %781
          %v783 = vrot.slane %v782, 4
          %v784 = vadd.f32 %v782, %v783
          %v785 = vrot.slane %v784, 2
          %v786 = vadd.f32 %v784, %v785
          %v787 = vrot.slane %v786, 1
          %v788 = vadd.f32 %v786, %v787
          %s789 = vtos %v788
          %p790 = scmp.eq.s32.totalorder %s35, 0
          %s791 = scalar_select %p790, 1.0, 0.0
          %vm792 = vcmp.eq.s32.totalorder %v579, 0
          %v793 = vstv %s591
          %v794 = vsel %vm792, %v793, 0.0
          %vm795 = vcmp.eq.s32.totalorder %v579, 1
          %v796 = vstv %s602
          %v797 = vsel %vm795, %v796, 0.0
          %v798 = vadd.f32 %v794, %v797
          %vm799 = vcmp.eq.s32.totalorder %v579, 2
          %v800 = vstv %s613
          %v801 = vsel %vm799, %v800, 0.0
          %v802 = vadd.f32 %v798, %v801
          %vm803 = vcmp.eq.s32.totalorder %v579, 3
          %v804 = vstv %s624
          %v805 = vsel %vm803, %v804, 0.0
          %v806 = vadd.f32 %v802, %v805
          %vm807 = vcmp.eq.s32.totalorder %v579, 4
          %v808 = vstv %s652
          %v809 = vsel %vm807, %v808, 0.0
          %vm810 = vcmp.eq.s32.totalorder %v579, 5
          %v811 = vstv %s665
          %v812 = vsel %vm810, %v811, 0.0
          %v813 = vadd.f32 %v809, %v812
          %vm814 = vcmp.eq.s32.totalorder %v579, 6
          %v815 = vstv %s679
          %v816 = vsel %vm814, %v815, 0.0
          %v817 = vadd.f32 %v813, %v816
          %vm818 = vcmp.eq.s32.totalorder %v579, 7
          %v819 = vstv %s711
          %v820 = vsel %vm818, %v819, 0.0
          %v821 = vadd.f32 %v817, %v820
          %vm822 = vcmp.eq.s32.totalorder %v579, 8
          %v823 = vstv %s789
          %v824 = vsel %vm822, %v823, 0.0
          %v825 = vadd.f32 %v821, %v824
          %v826 = vstv %s791
          %v827 = vmul.f32 %v826, %v825
          %v828 = vadd.f32 %v806, %v827
          %829 = vst [vmem:[%s470] sm:$0x1] %v828
        $region68: #{tpu_custom_call.1} parent=43 // pred_fallthru
          _
        %s830 = sand.u32 %s238, 1
        %s831 = scalar_lea.sflag [#allocation5], %s830
        %s832 = sand.u32 %s238, 1
        %s833 = scalar_lea.vmem [#allocation11], %s832
        // Predicated region
        $region69: #{tpu_custom_call.1} parent=43 // pred_check
          %p834 = pneg %p248
        $region70: #{tpu_custom_call.1} parent=43 // pred_check_branch
          %836 = sbr.rel (%p834) target = $region72
        $region71: #{tpu_custom_call.1} parent=43 // pred_region
          %s838 = ssub.s32 16, 16
          %839 = vsyncadd %s831, %s838
          %s840 = sadd.s32 %s35, %s34
          %s841 = smul.addr %s840, 16
          %s842 = scalar_lea.hbm %s6, %s841
          %s844 = sshll.u32 %s833, 4
          %s845 = int_to_ptr.vmem [resolvable:$true] %s844
          %847 = dma.vmem_to_hbm [thread:$0]  %s845, 16, %s842, %s831
        $region72: #{tpu_custom_call.1} parent=43 // pred_fallthru
          _
      $region44: #{tpu_custom_call.1} parent=5 // pred_fallthru
        _
      %p848 = scmp.le.s32.totalorder 2, %s24
      // Predicated region
      $region73: #{tpu_custom_call.1} parent=5 // pred_check
        %p849 = pneg %p848
      $region74: #{tpu_custom_call.1} parent=5 // pred_check_branch
        %851 = sbr.rel (%p849) target = $region76
      $region75: #{tpu_custom_call.1} parent=5 // pred_region
        %s852 = ssub.s32 %s24, 2
        // Predicated region
        $region77: #{tpu_custom_call.1} parent=75 // pred_check
          %p853 = pneg %p254
        $region78: #{tpu_custom_call.1} parent=75 // pred_check_branch
          %855 = sbr.rel (%p853) target = $region80
        $region79: #{tpu_custom_call.1} parent=75 // pred_region
          %s856 = sand.u32 %s239, 1
          %s857 = scalar_lea.sflag [#allocation5], %s856
          %s858 = sand.u32 %s239, 1
          %s859 = scalar_lea.vmem [#allocation11], %s858
          %860 = dma.done %s857, 16
        $region80: #{tpu_custom_call.1} parent=75 // pred_fallthru
          _
      $region76: #{tpu_custom_call.1} parent=5 // pred_fallthru
        _
    $region6: #{tpu_custom_call.1} parent=1 // loop_footer
      %s28 = sadd.s32 1, %s24
    $region7: #{tpu_custom_call.1} parent=1 // loop_footer_branch
      %23 = sbr.rel target = $region3
    $region8: #{tpu_custom_call.1} parent=1 // loop_exit
      _
    %861 = vsyncpa [#allocation4], 1
    %s862 = scalar_lea.sflag [#allocation4], 1
    %863 = vsyncpa %s862, 1
    %864 = vsyncpa [#allocation7], 1
    %s865 = scalar_lea.sflag [#allocation7], 1
    %866 = vsyncpa %s865, 1
    %867 = vsyncpa [#allocation10], 1
    %s868 = scalar_lea.sflag [#allocation10], 1
    %869 = vsyncpa %s868, 1
    %870 = vsyncpa [#allocation5], 1
    %s871 = scalar_lea.sflag [#allocation5], 1
    %872 = vsyncpa %s871, 1

</llo_original>
